<compile_context>
chip_gen: v7x
topology: tpu7x:2x2x1
jax: 0.10.0
libtpu: 0.0.40
codegen_flags: <defaults>
</compile_context>

<pallas_src>
import numpy as np
import jax
import jax.numpy as jnp
from jax.experimental import pallas as pl
from jax.experimental.pallas import tpu as pltpu


def lffn_kernel(x_ref, w1_ref, b1_ref, w2_ref, b2_ref,
                wse1_ref, bse1_ref, wse2_ref, bse2_ref,
                w3_ref, b3_ref,
                o_ref, pad_ref):
    Bt, Hp2, Wp2, Cp = pad_ref.shape
    H, W = Hp2 - 2, Wp2 - 2
    N = H * W
    M = Bt * N

    # ---- po_s2i part 1: 1x1 conv (+ folded BN) + ReLU ----------------------
    y1 = jnp.dot(x_ref[...].astype(jnp.bfloat16), w1_ref[...],
                 preferred_element_type=jnp.float32) + b1_ref[...]
    y1 = jnp.maximum(y1, 0.0)                                    # (M, Cp) f32

    # ---- po_s2i part 2: 3x3 conv (pad=1, folded BN) + ReLU -----------------
    # Interior is fully overwritten each step; only the 1-px halo is re-zeroed
    # (the scratch starts as garbage on each core and the "parallel" grid
    # partitioning across cores is opaque, so once-per-core init is unsafe).
    zrow = jnp.zeros((Bt, 1, Wp2, Cp), pad_ref.dtype)
    zcol = jnp.zeros((Bt, H, 1, Cp), pad_ref.dtype)
    pad_ref[:, 0:1, :, :] = zrow
    pad_ref[:, H + 1:H + 2, :, :] = zrow
    pad_ref[:, 1:H + 1, 0:1, :] = zcol
    pad_ref[:, 1:H + 1, W + 1:W + 2, :] = zcol
    pad_ref[:, 1:H + 1, 1:W + 1, :] = (
        y1.astype(pad_ref.dtype).reshape(Bt, H, W, Cp))

    # Nine accumulating K=Cp matmuls reading the shifted windows directly
    # (no im2col column scratch, no 9x vector-store amplification).
    acc = None
    for dh in range(3):
        for dw in range(3):
            tap = pad_ref[:, dh:dh + H, dw:dw + W, :].reshape(M, Cp)
            part = jnp.dot(tap, w2_ref[dh * 3 + dw],
                           preferred_element_type=jnp.float32)
            acc = part if acc is None else acc + part
    y2 = jnp.maximum(acc + b2_ref[...], 0.0)                     # (M, Cp) f32

    # ---- se: per-image global avg pool + 1x1 + ReLU + 1x1 + ReLU -----------
    y2_img = y2.reshape(Bt, N, Cp)
    gap = jnp.mean(y2_img, axis=1)                               # (Bt, Cp)
    se = jnp.maximum(
        jnp.dot(gap.astype(jnp.bfloat16), wse1_ref[...],
                preferred_element_type=jnp.float32) + bse1_ref[...], 0.0)
    se = jnp.maximum(
        jnp.dot(se.astype(jnp.bfloat16), wse2_ref[...],
                preferred_element_type=jnp.float32) + bse2_ref[...], 0.0)

    # ---- gate + po_i2s: 1x1 conv back to dim (lane-dense padded output) ----
    y3 = (y2_img * se[:, None, :]).reshape(M, Cp).astype(jnp.bfloat16)
    out = jnp.dot(y3, w3_ref[...],
                  preferred_element_type=jnp.float32) + b3_ref[...]
    o_ref[...] = out.astype(o_ref.dtype)


WEIGHT_ORDER = ['w1', 'b1', 'w2', 'b2',
                'wse1', 'bse1', 'wse2', 'bse2', 'w3', 'b3']


def _round_up(v, m):
    return ((v + m - 1) // m) * m


def prepare_params(p):
    """Fold eval-mode BN into the convs, lane-pad every channel dim to 128,
    and cast matmul weights to bf16 (biases stay f32, added post-accumulate)."""
    D, C = p['w1'].shape
    Cp = _round_up(C, 128)
    Dp = _round_up(D, 128)

    def padded(a, shape):
        z = jnp.zeros(shape, jnp.float32)
        return z.at[tuple(slice(0, s) for s in a.shape)].set(
            a.astype(jnp.float32))

    w1 = padded(p['w1'] * p['s1'], (D, Cp))
    b1 = padded(p['b1'] * p['s1'] + p['t1'], (1, Cp))
    w2 = jnp.zeros((3, 3, Cp, Cp), jnp.float32
                   ).at[:, :, :C, :C].set(p['w2'] * p['s2'])
    w2 = w2.reshape(9, Cp, Cp)
    b2 = padded(p['b2'] * p['s2'] + p['t2'], (1, Cp))
    wse1 = padded(p['wse1'], (Cp, Dp))
    bse1 = padded(p['bse1'], (1, Dp))
    wse2 = padded(p['wse2'], (Dp, Cp))
    bse2 = padded(p['bse2'], (1, Cp))
    w3 = padded(p['w3'], (Cp, Dp))
    b3 = padded(p['b3'], (1, Dp))
    bf16 = jnp.bfloat16
    return {'w1': w1.astype(bf16), 'b1': b1,
            'w2': w2.astype(bf16), 'b2': b2,
            'wse1': wse1.astype(bf16), 'bse1': bse1,
            'wse2': wse2.astype(bf16), 'bse2': bse2,
            'w3': w3.astype(bf16), 'b3': b3}


def _choose_bt(B, N, H, W, D, Cp, Dp, weight_bytes,
               row_target=2048, vmem_budget=40 * 1024 * 1024):
    """Batch-fold so each grid step runs M = Bt*N matmul rows, bounded by an
    explicit per-step VMEM estimate (v7x: 64 MiB physical) and a 2K-row target."""
    per_image = (2 * N * D * 4                 # x block, double-buffered (f32)
                 + 2 * N * Dp * 4              # output block, double-buffered
                 + (H + 2) * (W + 2) * Cp * 2  # bf16 zero-halo pad scratch
                 + 4 * N * Cp * 4)             # live f32 intermediates
    bt_vmem = max(1, (vmem_budget - 2 * weight_bytes) // per_image)
    bt = max(1, min(B, row_target // max(N, 1), bt_vmem))
    # Keep >= 2 grid steps when the batch allows it so the "parallel" axis can
    # be split across the two TensorCores of a v7x chip.
    if bt >= B and B > 1:
        bt = pl.cdiv(B, 2)
    # Prefer an 8-row-aligned Bt that divides B (no zero-image padding and no
    # extra HBM copy of x); then aligned-only; then one full-batch step.
    cand = next((c for c in range(bt, 0, -1)
                 if B % c == 0 and (c * N) % 8 == 0), None)
    if cand is None:
        cand = next((c for c in range(bt, 0, -1) if (c * N) % 8 == 0), None)
    if cand is None:
        cand = B   # single step: block == full array satisfies the (8,128) rule
    return cand


def lffn_pallas(x, params, patch_num):
    B, N, D = x.shape
    H = W = patch_num
    assert N == H * W
    prep = prepare_params(params)
    Cp = prep['w1'].shape[1]
    Dp = prep['w3'].shape[1]

    weight_bytes = sum(int(prep[k].size) * prep[k].dtype.itemsize
                       for k in WEIGHT_ORDER)
    Bt = _choose_bt(B, N, H, W, D, Cp, Dp, weight_bytes)
    G = pl.cdiv(B, Bt)
    Bp = G * Bt
    M = Bt * N

    x_flat = x.reshape(B * N, D)
    if Bp != B:   # only hit when no Bt dividing B satisfies the row alignment
        x_flat = jnp.concatenate(
            [x_flat, jnp.zeros(((Bp - B) * N, D), x.dtype)], axis=0)

    def const_spec(shape):
        zeros = (0,) * len(shape)
        return pl.BlockSpec(shape, lambda i: zeros)

    in_specs = [pl.BlockSpec((M, D), lambda i: (i, 0))]
    # Loop-invariant weights: constant-index blocks (DMA'd once).
    # TODO(synk): pipeline_mode=pl.Buffered(1) here once weights are non-toy.
    in_specs += [const_spec(prep[k].shape) for k in WEIGHT_ORDER]

    out = pl.pallas_call(
        lffn_kernel,
        out_shape=jax.ShapeDtypeStruct((Bp * N, Dp), x.dtype),
        grid_spec=pltpu.PrefetchScalarGridSpec(
            num_scalar_prefetch=0,
            grid=(G,),
            in_specs=in_specs,
            out_specs=pl.BlockSpec((M, Dp), lambda i: (i, 0)),
            scratch_shapes=[pltpu.VMEM((Bt, H + 2, W + 2, Cp), jnp.bfloat16)]),
        compiler_params=pltpu.CompilerParams(
            dimension_semantics=("parallel",),
            # Bt selection caps the estimated footprint at 40 MiB; 48 MiB stays
            # inside v7x's 64 MiB physical VMEM (ample on v5e/v6e's 128 MiB).
            vmem_limit_bytes=48 * 1024 * 1024),
    )(x_flat, *[prep[k] for k in WEIGHT_ORDER])

    # Trim the lane padding back to the module's (B, N, dim) interface.
    return out[:B * N, :D].reshape(B, N, D)


def make_params(dim, scale_dim, key):
    ks = jax.random.split(key, 20)
    eps = 1e-5

    def w(k, shape, s=0.2):
        return (s * jax.random.normal(k, shape)).astype(jnp.float32)

    def bn(k, c):
        kg, kb, km, kv = jax.random.split(k, 4)
        gamma = 1.0 + 0.1 * jax.random.normal(kg, (1, c))
        beta = 0.1 * jax.random.normal(kb, (1, c))
        mean = 0.1 * jax.random.normal(km, (1, c))
        var = 0.5 + jax.random.uniform(kv, (1, c))
        scale = gamma * jax.lax.rsqrt(var + eps)
        shift = beta - mean * scale
        return scale.astype(jnp.float32), shift.astype(jnp.float32)

    s1, t1 = bn(ks[2], scale_dim)
    s2, t2 = bn(ks[5], scale_dim)
    return {
        'w1': w(ks[0], (dim, scale_dim)),        'b1': w(ks[1], (1, scale_dim)),
        's1': s1,                                't1': t1,
        'w2': w(ks[3], (3, 3, scale_dim, scale_dim)),
        'b2': w(ks[4], (1, scale_dim)),
        's2': s2,                                't2': t2,
        'wse1': w(ks[6], (scale_dim, dim)),      'bse1': w(ks[7], (1, dim)),
        'wse2': w(ks[8], (dim, scale_dim)),      'bse2': w(ks[9], (1, scale_dim)),
        'w3': w(ks[10], (scale_dim, dim)),       'b3': w(ks[11], (1, dim)),
    }


def lffn_reference(x, p, patch_num):
    """Pure-JAX f32 reference (original unfused math: conv + BN(eval) + ReLU)."""
    B, N, D = x.shape
    H = W = patch_num
    xi = x.reshape(B, H, W, D)
    y1 = jnp.einsum('bhwd,dc->bhwc', xi, p['w1']) + p['b1']
    y1 = jnp.maximum(y1 * p['s1'] + p['t1'], 0.0)
    yp = jnp.pad(y1, ((0, 0), (1, 1), (1, 1), (0, 0)))
    acc = jnp.zeros(y1.shape, jnp.float32) + p['b2']
    for dh in range(3):
        for dw in range(3):
            acc = acc + jnp.einsum('bhwc,cd->bhwd',
                                   yp[:, dh:dh + H, dw:dw + W, :],
                                   p['w2'][dh, dw])
    y2 = jnp.maximum(acc * p['s2'] + p['t2'], 0.0)
    gap = jnp.mean(y2, axis=(1, 2))
    se = jnp.maximum(gap @ p['wse1'] + p['bse1'], 0.0)
    se = jnp.maximum(se @ p['wse2'] + p['bse2'], 0.0)
    y3 = y2 * se[:, None, None, :]
    out = jnp.einsum('bhwc,cd->bhwd', y3, p['w3']) + p['b3']
    return out.reshape(B, N, D)


if __name__ == "__main__":
    patch_num, patch_size, expand_ratio = 4, 4, 4
    dim = patch_size ** 2            # 16
    scale_dim = expand_ratio * dim   # 64
    B = 2
    N = patch_num ** 2               # 16

    key = jax.random.PRNGKey(0)
    kx, kp = jax.random.split(key)
    x = jax.random.normal(kx, (B, N, dim), jnp.float32)
    params = make_params(dim, scale_dim, kp)

    out = lffn_pallas(x, params, patch_num)
    out = jax.block_until_ready(out)

    ref = lffn_reference(x, params, patch_num)
    # Kernel uses bf16 MXU operands with f32 accumulation vs an all-f32
    # reference: expected rms error ~1e-2 at these magnitudes, so 5e-2 bounds
    # it with margin while still catching any structural error (those are O(1)).
    np.testing.assert_allclose(np.asarray(out), np.asarray(ref),
                               rtol=5e-2, atol=5e-2)
    print("KERNEL_OK")
</pallas_src>

<mosaic_0001>
module attributes {stable_mosaic.version = 11 : i64} {
  func.func @lffn_kernel(%arg0: i32, %arg1: memref<16x16xf32, #tpu.memory_space<vmem>>, %arg2: memref<16x128xbf16, #tpu.memory_space<vmem>>, %arg3: memref<1x128xf32, #tpu.memory_space<vmem>>, %arg4: memref<9x128x128xbf16, #tpu.memory_space<vmem>>, %arg5: memref<1x128xf32, #tpu.memory_space<vmem>>, %arg6: memref<128x128xbf16, #tpu.memory_space<vmem>>, %arg7: memref<1x128xf32, #tpu.memory_space<vmem>>, %arg8: memref<128x128xbf16, #tpu.memory_space<vmem>>, %arg9: memref<1x128xf32, #tpu.memory_space<vmem>>, %arg10: memref<128x128xbf16, #tpu.memory_space<vmem>>, %arg11: memref<1x128xf32, #tpu.memory_space<vmem>>, %arg12: memref<16x128xf32, #tpu.memory_space<vmem>>, %arg13: memref<1x6x6x128xbf16, #tpu.memory_space<vmem>>) attributes {dimension_semantics = [#tpu.dimension_semantics<parallel>], iteration_bounds = array<i64: 2>, scalar_prefetch = 0 : i64, scratch_operands = 1 : i64, tpu.core_type = #tpu.core_type<tc>, window_params = [{transform_indices = @transform_0, window_bounds = array<i64: 16, 16>}, {pipeline_mode = #tpu.pipeline_mode<synchronous>, transform_indices = @transform_1, window_bounds = array<i64: 16, 128>}, {pipeline_mode = #tpu.pipeline_mode<synchronous>, transform_indices = @transform_2, window_bounds = array<i64: 1, 128>}, {pipeline_mode = #tpu.pipeline_mode<synchronous>, transform_indices = @transform_3, window_bounds = array<i64: 9, 128, 128>}, {pipeline_mode = #tpu.pipeline_mode<synchronous>, transform_indices = @transform_4, window_bounds = array<i64: 1, 128>}, {pipeline_mode = #tpu.pipeline_mode<synchronous>, transform_indices = @transform_5, window_bounds = array<i64: 128, 128>}, {pipeline_mode = #tpu.pipeline_mode<synchronous>, transform_indices = @transform_6, window_bounds = array<i64: 1, 128>}, {pipeline_mode = #tpu.pipeline_mode<synchronous>, transform_indices = @transform_7, window_bounds = array<i64: 128, 128>}, {pipeline_mode = #tpu.pipeline_mode<synchronous>, transform_indices = @transform_8, window_bounds = array<i64: 1, 128>}, {pipeline_mode = #tpu.pipeline_mode<synchronous>, transform_indices = @transform_9, window_bounds = array<i64: 128, 128>}, {pipeline_mode = #tpu.pipeline_mode<synchronous>, transform_indices = @transform_10, window_bounds = array<i64: 1, 128>}, {transform_indices = @transform_11, window_bounds = array<i64: 16, 128>}]} {
    %c0 = arith.constant 0 : index
    %c0_0 = arith.constant 0 : index
    %0 = vector.load %arg1[%c0, %c0_0] : memref<16x16xf32, #tpu.memory_space<vmem>>, vector<16x16xf32>
    %1 = arith.truncf %0 : vector<16x16xf32> to vector<16x16xbf16>
    %c0_1 = arith.constant 0 : index
    %c0_2 = arith.constant 0 : index
    %2 = vector.load %arg2[%c0_1, %c0_2] : memref<16x128xbf16, #tpu.memory_space<vmem>>, vector<16x128xbf16>
    %cst = arith.constant dense<0.000000e+00> : vector<16x128xf32>
    %3 = tpu.matmul %1, %2, %cst {dimension_numbers = #tpu.dot_dimension_numbers<[1], [0], [0], [1], [0, 0, 1, 1], [], []>} : vector<16x16xbf16>, vector<16x128xbf16>, vector<16x128xf32> -> vector<16x128xf32>
    %c0_3 = arith.constant 0 : index
    %c0_4 = arith.constant 0 : index
    %4 = vector.load %arg3[%c0_3, %c0_4] : memref<1x128xf32, #tpu.memory_space<vmem>>, vector<1x128xf32>
    %5 = vector.broadcast %4 : vector<1x128xf32> to vector<16x128xf32>
    %6 = arith.addf %3, %5 : vector<16x128xf32>
    %cst_5 = arith.constant 0.000000e+00 : f32
    %7 = vector.broadcast %cst_5 : f32 to vector<16x128xf32>
    %8 = arith.maximumf %6, %7 : vector<16x128xf32>
    %cst_6 = arith.constant 0.000000e+00 : bf16
    %9 = vector.broadcast %cst_6 : bf16 to vector<1x1x6x128xbf16>
    %cst_7 = arith.constant 0.000000e+00 : bf16
    %10 = vector.broadcast %cst_7 : bf16 to vector<1x4x1x128xbf16>
    %c0_8 = arith.constant 0 : index
    %c0_9 = arith.constant 0 : index
    %c0_10 = arith.constant 0 : index
    %c0_11 = arith.constant 0 : index
    %11 = vector.load %arg13[%c0_8, %c0_9, %c0_10, %c0_11] : memref<1x6x6x128xbf16, #tpu.memory_space<vmem>>, vector<1x1x6x128xbf16>
    tpu.vector_store %arg13[%c0_8, %c0_9, %c0_10, %c0_11], %9 {strides = array<i32>} : memref<1x6x6x128xbf16, #tpu.memory_space<vmem>>, vector<1x1x6x128xbf16>,
    %c0_12 = arith.constant 0 : index
    %c5 = arith.constant 5 : index
    %c0_13 = arith.constant 0 : index
    %c0_14 = arith.constant 0 : index
    %12 = vector.load %arg13[%c0_12, %c5, %c0_13, %c0_14] : memref<1x6x6x128xbf16, #tpu.memory_space<vmem>>, vector<1x1x6x128xbf16>
    tpu.vector_store %arg13[%c0_12, %c5, %c0_13, %c0_14], %9 {strides = array<i32>} : memref<1x6x6x128xbf16, #tpu.memory_space<vmem>>, vector<1x1x6x128xbf16>,
    %c0_15 = arith.constant 0 : index
    %c1 = arith.constant 1 : index
    %c0_16 = arith.constant 0 : index
    %c0_17 = arith.constant 0 : index
    %13 = vector.load %arg13[%c0_15, %c1, %c0_16, %c0_17] : memref<1x6x6x128xbf16, #tpu.memory_space<vmem>>, vector<1x4x1x128xbf16>
    tpu.vector_store %arg13[%c0_15, %c1, %c0_16, %c0_17], %10 {strides = array<i32>} : memref<1x6x6x128xbf16, #tpu.memory_space<vmem>>, vector<1x4x1x128xbf16>,
    %c0_18 = arith.constant 0 : index
    %c1_19 = arith.constant 1 : index
    %c5_20 = arith.constant 5 : index
    %c0_21 = arith.constant 0 : index
    %14 = vector.load %arg13[%c0_18, %c1_19, %c5_20, %c0_21] : memref<1x6x6x128xbf16, #tpu.memory_space<vmem>>, vector<1x4x1x128xbf16>
    tpu.vector_store %arg13[%c0_18, %c1_19, %c5_20, %c0_21], %10 {strides = array<i32>} : memref<1x6x6x128xbf16, #tpu.memory_space<vmem>>, vector<1x4x1x128xbf16>,
    %15 = arith.truncf %8 : vector<16x128xf32> to vector<16x128xbf16>
    %16 = vector.shape_cast %15 : vector<16x128xbf16> to vector<1x4x4x128xbf16>
    %c0_22 = arith.constant 0 : index
    %c1_23 = arith.constant 1 : index
    %c1_24 = arith.constant 1 : index
    %c0_25 = arith.constant 0 : index
    %17 = vector.load %arg13[%c0_22, %c1_23, %c1_24, %c0_25] : memref<1x6x6x128xbf16, #tpu.memory_space<vmem>>, vector<1x4x4x128xbf16>
    tpu.vector_store %arg13[%c0_22, %c1_23, %c1_24, %c0_25], %16 {strides = array<i32>} : memref<1x6x6x128xbf16, #tpu.memory_space<vmem>>, vector<1x4x4x128xbf16>,
    %c0_26 = arith.constant 0 : index
    %c0_27 = arith.constant 0 : index
    %c0_28 = arith.constant 0 : index
    %c0_29 = arith.constant 0 : index
    %18 = vector.load %arg13[%c0_26, %c0_27, %c0_28, %c0_29] : memref<1x6x6x128xbf16, #tpu.memory_space<vmem>>, vector<1x4x4x128xbf16>
    %19 = vector.shape_cast %18 : vector<1x4x4x128xbf16> to vector<16x128xbf16>
    %c0_30 = arith.constant 0 : index
    %c0_31 = arith.constant 0 : index
    %c0_32 = arith.constant 0 : index
    %20 = vector.load %arg4[%c0_30, %c0_31, %c0_32] : memref<9x128x128xbf16, #tpu.memory_space<vmem>>, vector<1x128x128xbf16>
    %21 = vector.shape_cast %20 : vector<1x128x128xbf16> to vector<128x128xbf16>
    %cst_33 = arith.constant dense<0.000000e+00> : vector<16x128xf32>
    %22 = tpu.matmul %19, %21, %cst_33 {dimension_numbers = #tpu.dot_dimension_numbers<[1], [0], [0], [1], [0, 0, 1, 1], [], []>} : vector<16x128xbf16>, vector<128x128xbf16>, vector<16x128xf32> -> vector<16x128xf32>
    %c0_34 = arith.constant 0 : index
    %c0_35 = arith.constant 0 : index
    %c1_36 = arith.constant 1 : index
    %c0_37 = arith.constant 0 : index
    %23 = vector.load %arg13[%c0_34, %c0_35, %c1_36, %c0_37] : memref<1x6x6x128xbf16, #tpu.memory_space<vmem>>, vector<1x4x4x128xbf16>
    %24 = vector.shape_cast %23 : vector<1x4x4x128xbf16> to vector<16x128xbf16>
    %c1_38 = arith.constant 1 : index
    %c0_39 = arith.constant 0 : index
    %c0_40 = arith.constant 0 : index
    %25 = vector.load %arg4[%c1_38, %c0_39, %c0_40] : memref<9x128x128xbf16, #tpu.memory_space<vmem>>, vector<1x128x128xbf16>
    %26 = vector.shape_cast %25 : vector<1x128x128xbf16> to vector<128x128xbf16>
    %cst_41 = arith.constant dense<0.000000e+00> : vector<16x128xf32>
    %27 = tpu.matmul %24, %26, %cst_41 {dimension_numbers = #tpu.dot_dimension_numbers<[1], [0], [0], [1], [0, 0, 1, 1], [], []>} : vector<16x128xbf16>, vector<128x128xbf16>, vector<16x128xf32> -> vector<16x128xf32>
    %28 = arith.addf %22, %27 : vector<16x128xf32>
    %c0_42 = arith.constant 0 : index
    %c0_43 = arith.constant 0 : index
    %c2 = arith.constant 2 : index
    %c0_44 = arith.constant 0 : index
    %29 = vector.load %arg13[%c0_42, %c0_43, %c2, %c0_44] : memref<1x6x6x128xbf16, #tpu.memory_space<vmem>>, vector<1x4x4x128xbf16>
    %30 = vector.shape_cast %29 : vector<1x4x4x128xbf16> to vector<16x128xbf16>
    %c2_45 = arith.constant 2 : index
    %c0_46 = arith.constant 0 : index
    %c0_47 = arith.constant 0 : index
    %31 = vector.load %arg4[%c2_45, %c0_46, %c0_47] : memref<9x128x128xbf16, #tpu.memory_space<vmem>>, vector<1x128x128xbf16>
    %32 = vector.shape_cast %31 : vector<1x128x128xbf16> to vector<128x128xbf16>
    %cst_48 = arith.constant dense<0.000000e+00> : vector<16x128xf32>
    %33 = tpu.matmul %30, %32, %cst_48 {dimension_numbers = #tpu.dot_dimension_numbers<[1], [0], [0], [1], [0, 0, 1, 1], [], []>} : vector<16x128xbf16>, vector<128x128xbf16>, vector<16x128xf32> -> vector<16x128xf32>
    %34 = arith.addf %28, %33 : vector<16x128xf32>
    %c0_49 = arith.constant 0 : index
    %c1_50 = arith.constant 1 : index
    %c0_51 = arith.constant 0 : index
    %c0_52 = arith.constant 0 : index
    %35 = vector.load %arg13[%c0_49, %c1_50, %c0_51, %c0_52] : memref<1x6x6x128xbf16, #tpu.memory_space<vmem>>, vector<1x4x4x128xbf16>
    %36 = vector.shape_cast %35 : vector<1x4x4x128xbf16> to vector<16x128xbf16>
    %c3 = arith.constant 3 : index
    %c0_53 = arith.constant 0 : index
    %c0_54 = arith.constant 0 : index
    %37 = vector.load %arg4[%c3, %c0_53, %c0_54] : memref<9x128x128xbf16, #tpu.memory_space<vmem>>, vector<1x128x128xbf16>
    %38 = vector.shape_cast %37 : vector<1x128x128xbf16> to vector<128x128xbf16>
    %cst_55 = arith.constant dense<0.000000e+00> : vector<16x128xf32>
    %39 = tpu.matmul %36, %38, %cst_55 {dimension_numbers = #tpu.dot_dimension_numbers<[1], [0], [0], [1], [0, 0, 1, 1], [], []>} : vector<16x128xbf16>, vector<128x128xbf16>, vector<16x128xf32> -> vector<16x128xf32>
    %40 = arith.addf %34, %39 : vector<16x128xf32>
    %c0_56 = arith.constant 0 : index
    %c1_57 = arith.constant 1 : index
    %c1_58 = arith.constant 1 : index
    %c0_59 = arith.constant 0 : index
    %41 = vector.load %arg13[%c0_56, %c1_57, %c1_58, %c0_59] : memref<1x6x6x128xbf16, #tpu.memory_space<vmem>>, vector<1x4x4x128xbf16>
    %42 = vector.shape_cast %41 : vector<1x4x4x128xbf16> to vector<16x128xbf16>
    %c4 = arith.constant 4 : index
    %c0_60 = arith.constant 0 : index
    %c0_61 = arith.constant 0 : index
    %43 = vector.load %arg4[%c4, %c0_60, %c0_61] : memref<9x128x128xbf16, #tpu.memory_space<vmem>>, vector<1x128x128xbf16>
    %44 = vector.shape_cast %43 : vector<1x128x128xbf16> to vector<128x128xbf16>
    %cst_62 = arith.constant dense<0.000000e+00> : vector<16x128xf32>
    %45 = tpu.matmul %42, %44, %cst_62 {dimension_numbers = #tpu.dot_dimension_numbers<[1], [0], [0], [1], [0, 0, 1, 1], [], []>} : vector<16x128xbf16>, vector<128x128xbf16>, vector<16x128xf32> -> vector<16x128xf32>
    %46 = arith.addf %40, %45 : vector<16x128xf32>
    %c0_63 = arith.constant 0 : index
    %c1_64 = arith.constant 1 : index
    %c2_65 = arith.constant 2 : index
    %c0_66 = arith.constant 0 : index
    %47 = vector.load %arg13[%c0_63, %c1_64, %c2_65, %c0_66] : memref<1x6x6x128xbf16, #tpu.memory_space<vmem>>, vector<1x4x4x128xbf16>
    %48 = vector.shape_cast %47 : vector<1x4x4x128xbf16> to vector<16x128xbf16>
    %c5_67 = arith.constant 5 : index
    %c0_68 = arith.constant 0 : index
    %c0_69 = arith.constant 0 : index
    %49 = vector.load %arg4[%c5_67, %c0_68, %c0_69] : memref<9x128x128xbf16, #tpu.memory_space<vmem>>, vector<1x128x128xbf16>
    %50 = vector.shape_cast %49 : vector<1x128x128xbf16> to vector<128x128xbf16>
    %cst_70 = arith.constant dense<0.000000e+00> : vector<16x128xf32>
    %51 = tpu.matmul %48, %50, %cst_70 {dimension_numbers = #tpu.dot_dimension_numbers<[1], [0], [0], [1], [0, 0, 1, 1], [], []>} : vector<16x128xbf16>, vector<128x128xbf16>, vector<16x128xf32> -> vector<16x128xf32>
    %52 = arith.addf %46, %51 : vector<16x128xf32>
    %c0_71 = arith.constant 0 : index
    %c2_72 = arith.constant 2 : index
    %c0_73 = arith.constant 0 : index
    %c0_74 = arith.constant 0 : index
    %53 = vector.load %arg13[%c0_71, %c2_72, %c0_73, %c0_74] : memref<1x6x6x128xbf16, #tpu.memory_space<vmem>>, vector<1x4x4x128xbf16>
    %54 = vector.shape_cast %53 : vector<1x4x4x128xbf16> to vector<16x128xbf16>
    %c6 = arith.constant 6 : index
    %c0_75 = arith.constant 0 : index
    %c0_76 = arith.constant 0 : index
    %55 = vector.load %arg4[%c6, %c0_75, %c0_76] : memref<9x128x128xbf16, #tpu.memory_space<vmem>>, vector<1x128x128xbf16>
    %56 = vector.shape_cast %55 : vector<1x128x128xbf16> to vector<128x128xbf16>
    %cst_77 = arith.constant dense<0.000000e+00> : vector<16x128xf32>
    %57 = tpu.matmul %54, %56, %cst_77 {dimension_numbers = #tpu.dot_dimension_numbers<[1], [0], [0], [1], [0, 0, 1, 1], [], []>} : vector<16x128xbf16>, vector<128x128xbf16>, vector<16x128xf32> -> vector<16x128xf32>
    %58 = arith.addf %52, %57 : vector<16x128xf32>
    %c0_78 = arith.constant 0 : index
    %c2_79 = arith.constant 2 : index
    %c1_80 = arith.constant 1 : index
    %c0_81 = arith.constant 0 : index
    %59 = vector.load %arg13[%c0_78, %c2_79, %c1_80, %c0_81] : memref<1x6x6x128xbf16, #tpu.memory_space<vmem>>, vector<1x4x4x128xbf16>
    %60 = vector.shape_cast %59 : vector<1x4x4x128xbf16> to vector<16x128xbf16>
    %c7 = arith.constant 7 : index
    %c0_82 = arith.constant 0 : index
    %c0_83 = arith.constant 0 : index
    %61 = vector.load %arg4[%c7, %c0_82, %c0_83] : memref<9x128x128xbf16, #tpu.memory_space<vmem>>, vector<1x128x128xbf16>
    %62 = vector.shape_cast %61 : vector<1x128x128xbf16> to vector<128x128xbf16>
    %cst_84 = arith.constant dense<0.000000e+00> : vector<16x128xf32>
    %63 = tpu.matmul %60, %62, %cst_84 {dimension_numbers = #tpu.dot_dimension_numbers<[1], [0], [0], [1], [0, 0, 1, 1], [], []>} : vector<16x128xbf16>, vector<128x128xbf16>, vector<16x128xf32> -> vector<16x128xf32>
    %64 = arith.addf %58, %63 : vector<16x128xf32>
    %c0_85 = arith.constant 0 : index
    %c2_86 = arith.constant 2 : index
    %c2_87 = arith.constant 2 : index
    %c0_88 = arith.constant 0 : index
    %65 = vector.load %arg13[%c0_85, %c2_86, %c2_87, %c0_88] : memref<1x6x6x128xbf16, #tpu.memory_space<vmem>>, vector<1x4x4x128xbf16>
    %66 = vector.shape_cast %65 : vector<1x4x4x128xbf16> to vector<16x128xbf16>
    %c8 = arith.constant 8 : index
    %c0_89 = arith.constant 0 : index
    %c0_90 = arith.constant 0 : index
    %67 = vector.load %arg4[%c8, %c0_89, %c0_90] : memref<9x128x128xbf16, #tpu.memory_space<vmem>>, vector<1x128x128xbf16>
    %68 = vector.shape_cast %67 : vector<1x128x128xbf16> to vector<128x128xbf16>
    %cst_91 = arith.constant dense<0.000000e+00> : vector<16x128xf32>
    %69 = tpu.matmul %66, %68, %cst_91 {dimension_numbers = #tpu.dot_dimension_numbers<[1], [0], [0], [1], [0, 0, 1, 1], [], []>} : vector<16x128xbf16>, vector<128x128xbf16>, vector<16x128xf32> -> vector<16x128xf32>
    %70 = arith.addf %64, %69 : vector<16x128xf32>
    %c0_92 = arith.constant 0 : index
    %c0_93 = arith.constant 0 : index
    %71 = vector.load %arg5[%c0_92, %c0_93] : memref<1x128xf32, #tpu.memory_space<vmem>>, vector<1x128xf32>
    %72 = vector.broadcast %71 : vector<1x128xf32> to vector<16x128xf32>
    %73 = arith.addf %70, %72 : vector<16x128xf32>
    %cst_94 = arith.constant 0.000000e+00 : f32
    %74 = vector.broadcast %cst_94 : f32 to vector<16x128xf32>
    %75 = arith.maximumf %73, %74 : vector<16x128xf32>
    %76 = vector.shape_cast %75 : vector<16x128xf32> to vector<1x16x128xf32>
    %cst_95 = arith.constant dense<0.000000e+00> : vector<1x128xf32>
    %77 = vector.multi_reduction <add>, %76, %cst_95 [1] : vector<1x16x128xf32> to vector<1x128xf32>
    %cst_96 = arith.constant 1.600000e+01 : f32
    %78 = vector.broadcast %cst_96 : f32 to vector<1x128xf32>
    %79 = arith.divf %77, %78 : vector<1x128xf32>
    %80 = arith.truncf %79 : vector<1x128xf32> to vector<1x128xbf16>
    %c0_97 = arith.constant 0 : index
    %c0_98 = arith.constant 0 : index
    %81 = vector.load %arg6[%c0_97, %c0_98] : memref<128x128xbf16, #tpu.memory_space<vmem>>, vector<128x128xbf16>
    %cst_99 = arith.constant dense<0.000000e+00> : vector<1x128xf32>
    %82 = tpu.matmul %80, %81, %cst_99 {dimension_numbers = #tpu.dot_dimension_numbers<[1], [0], [0], [1], [0, 0, 1, 1], [], []>} : vector<1x128xbf16>, vector<128x128xbf16>, vector<1x128xf32> -> vector<1x128xf32>
    %c0_100 = arith.constant 0 : index
    %c0_101 = arith.constant 0 : index
    %83 = vector.load %arg7[%c0_100, %c0_101] : memref<1x128xf32, #tpu.memory_space<vmem>>, vector<1x128xf32>
    %84 = arith.addf %82, %83 : vector<1x128xf32>
    %cst_102 = arith.constant 0.000000e+00 : f32
    %85 = vector.broadcast %cst_102 : f32 to vector<1x128xf32>
    %86 = arith.maximumf %84, %85 : vector<1x128xf32>
    %87 = arith.truncf %86 : vector<1x128xf32> to vector<1x128xbf16>
    %c0_103 = arith.constant 0 : index
    %c0_104 = arith.constant 0 : index
    %88 = vector.load %arg8[%c0_103, %c0_104] : memref<128x128xbf16, #tpu.memory_space<vmem>>, vector<128x128xbf16>
    %cst_105 = arith.constant dense<0.000000e+00> : vector<1x128xf32>
    %89 = tpu.matmul %87, %88, %cst_105 {dimension_numbers = #tpu.dot_dimension_numbers<[1], [0], [0], [1], [0, 0, 1, 1], [], []>} : vector<1x128xbf16>, vector<128x128xbf16>, vector<1x128xf32> -> vector<1x128xf32>
    %c0_106 = arith.constant 0 : index
    %c0_107 = arith.constant 0 : index
    %90 = vector.load %arg9[%c0_106, %c0_107] : memref<1x128xf32, #tpu.memory_space<vmem>>, vector<1x128xf32>
    %91 = arith.addf %89, %90 : vector<1x128xf32>
    %cst_108 = arith.constant 0.000000e+00 : f32
    %92 = vector.broadcast %cst_108 : f32 to vector<1x128xf32>
    %93 = arith.maximumf %91, %92 : vector<1x128xf32>
    %94 = vector.shape_cast %93 : vector<1x128xf32> to vector<1x1x128xf32>
    %95 = vector.broadcast %94 : vector<1x1x128xf32> to vector<1x16x128xf32>
    %96 = arith.mulf %76, %95 : vector<1x16x128xf32>
    %97 = vector.shape_cast %96 : vector<1x16x128xf32> to vector<16x128xf32>
    %98 = arith.truncf %97 : vector<16x128xf32> to vector<16x128xbf16>
    %c0_109 = arith.constant 0 : index
    %c0_110 = arith.constant 0 : index
    %99 = vector.load %arg10[%c0_109, %c0_110] : memref<128x128xbf16, #tpu.memory_space<vmem>>, vector<128x128xbf16>
    %cst_111 = arith.constant dense<0.000000e+00> : vector<16x128xf32>
    %100 = tpu.matmul %98, %99, %cst_111 {dimension_numbers = #tpu.dot_dimension_numbers<[1], [0], [0], [1], [0, 0, 1, 1], [], []>} : vector<16x128xbf16>, vector<128x128xbf16>, vector<16x128xf32> -> vector<16x128xf32>
    %c0_112 = arith.constant 0 : index
    %c0_113 = arith.constant 0 : index
    %101 = vector.load %arg11[%c0_112, %c0_113] : memref<1x128xf32, #tpu.memory_space<vmem>>, vector<1x128xf32>
    %102 = vector.broadcast %101 : vector<1x128xf32> to vector<16x128xf32>
    %103 = arith.addf %100, %102 : vector<16x128xf32>
    %c0_114 = arith.constant 0 : index
    %c0_115 = arith.constant 0 : index
    %104 = vector.load %arg12[%c0_114, %c0_115] : memref<16x128xf32, #tpu.memory_space<vmem>>, vector<16x128xf32>
    tpu.vector_store %arg12[%c0_114, %c0_115], %103 {strides = array<i32>} : memref<16x128xf32, #tpu.memory_space<vmem>>, vector<16x128xf32>,
    return
  }
  func.func @transform_0(%arg0: i32) -> (i32, i32) {
    %c0_i32 = arith.constant 0 : i32
    %c0_i32_0 = arith.constant 0 : i32
    return %arg0, %c0_i32 : i32, i32
  }
  func.func @transform_1(%arg0: i32) -> (i32, i32) {
    %c0_i32 = arith.constant 0 : i32
    %c0_i32_0 = arith.constant 0 : i32
    %c0_i32_1 = arith.constant 0 : i32
    return %c0_i32, %c0_i32_0 : i32, i32
  }
  func.func @transform_2(%arg0: i32) -> (i32, i32) {
    %c0_i32 = arith.constant 0 : i32
    %c0_i32_0 = arith.constant 0 : i32
    %c0_i32_1 = arith.constant 0 : i32
    return %c0_i32, %c0_i32_0 : i32, i32
  }
  func.func @transform_3(%arg0: i32) -> (i32, i32, i32) {
    %c0_i32 = arith.constant 0 : i32
    %c0_i32_0 = arith.constant 0 : i32
    %c0_i32_1 = arith.constant 0 : i32
    %c0_i32_2 = arith.constant 0 : i32
    return %c0_i32, %c0_i32_0, %c0_i32_1 : i32, i32, i32
  }
  func.func @transform_4(%arg0: i32) -> (i32, i32) {
    %c0_i32 = arith.constant 0 : i32
    %c0_i32_0 = arith.constant 0 : i32
    %c0_i32_1 = arith.constant 0 : i32
    return %c0_i32, %c0_i32_0 : i32, i32
  }
  func.func @transform_5(%arg0: i32) -> (i32, i32) {
    %c0_i32 = arith.constant 0 : i32
    %c0_i32_0 = arith.constant 0 : i32
    %c0_i32_1 = arith.constant 0 : i32
    return %c0_i32, %c0_i32_0 : i32, i32
  }
  func.func @transform_6(%arg0: i32) -> (i32, i32) {
    %c0_i32 = arith.constant 0 : i32
    %c0_i32_0 = arith.constant 0 : i32
    %c0_i32_1 = arith.constant 0 : i32
    return %c0_i32, %c0_i32_0 : i32, i32
  }
  func.func @transform_7(%arg0: i32) -> (i32, i32) {
    %c0_i32 = arith.constant 0 : i32
    %c0_i32_0 = arith.constant 0 : i32
    %c0_i32_1 = arith.constant 0 : i32
    return %c0_i32, %c0_i32_0 : i32, i32
  }
  func.func @transform_8(%arg0: i32) -> (i32, i32) {
    %c0_i32 = arith.constant 0 : i32
    %c0_i32_0 = arith.constant 0 : i32
    %c0_i32_1 = arith.constant 0 : i32
    return %c0_i32, %c0_i32_0 : i32, i32
  }
  func.func @transform_9(%arg0: i32) -> (i32, i32) {
    %c0_i32 = arith.constant 0 : i32
    %c0_i32_0 = arith.constant 0 : i32
    %c0_i32_1 = arith.constant 0 : i32
    return %c0_i32, %c0_i32_0 : i32, i32
  }
  func.func @transform_10(%arg0: i32) -> (i32, i32) {
    %c0_i32 = arith.constant 0 : i32
    %c0_i32_0 = arith.constant 0 : i32
    %c0_i32_1 = arith.constant 0 : i32
    return %c0_i32, %c0_i32_0 : i32, i32
  }
  func.func @transform_11(%arg0: i32) -> (i32, i32) {
    %c0_i32 = arith.constant 0 : i32
    %c0_i32_0 = arith.constant 0 : i32
    return %arg0, %c0_i32 : i32, i32
  }
}

</mosaic_0001>

<llo_original>
// kernel: tpu_custom_call.1
$region0: #{tpu_custom_call.1}
  #allocation0 [shape = 'u32[]', space=smem, size = 0x4, offset = 0x4, fixed_abs, tag = 'smem constant byte address 0x4 - core index']
  #allocation1 [shape = 'u32[144,128]{1,0:T(1,128)}', space=vmem, size = 0x12000, scoped, tag = 'internal scratch']
  #allocation2 [shape = 'bf16[1,6,6,128]{3,2,1,0:T(8,128)(2,1)}', space=vmem, size = 0x3000, scoped, tag = 'scratch operand']
  %s0 = inlined_call_operand.vmem [shape: f32[32,16], index: 0, kind: input, shape index: {}]
  %s1 = inlined_call_operand.hbm [shape: bf16[16,128], index: 1, kind: input, shape index: {}]
  %s2 = inlined_call_operand.vmem [shape: f32[1,128], index: 2, kind: input, shape index: {}]
  %s3 = inlined_call_operand.hbm [shape: bf16[9,128,128], index: 3, kind: input, shape index: {}]
  %s4 = inlined_call_operand.vmem [shape: f32[1,128], index: 4, kind: input, shape index: {}]
  %s5 = inlined_call_operand.vmem [shape: bf16[128,128], index: 5, kind: input, shape index: {}]
  %s6 = inlined_call_operand.vmem [shape: f32[1,128], index: 6, kind: input, shape index: {}]
  %s7 = inlined_call_operand.hbm [shape: bf16[128,128], index: 7, kind: input, shape index: {}]
  %s8 = inlined_call_operand.vmem [shape: f32[1,128], index: 8, kind: input, shape index: {}]
  %s9 = inlined_call_operand.hbm [shape: bf16[128,128], index: 9, kind: input, shape index: {}]
  %s10 = inlined_call_operand.vmem [shape: f32[1,128], index: 10, kind: input, shape index: {}]
  %s11 = inlined_call_operand.hbm [shape: f32[32,128], index: 11, kind: output, shape index: {}]
  %s12 = sld [smem:[#allocation0]]
  $region93: #{tpu_custom_call.1} parent=0
    _
  %s14 = ssub.s32 1, %s12
  %s15 = scalar_select 0, %s14, %s12
  $region1: #{tpu_custom_call.1} parent=0
    #allocation3 [shape = 'u8[4096]{0}', space=vmem, size = 0x1000, scoped, tag = 'input window, operand 1, single buffered']
    #allocation4 [shape = 's32[2]{0}', space=sflag, size = 0x8, scoped, tag = 'scoped memory for tpu_custom_call.1']
    #allocation5 [shape = 's32[2]{0}', space=sflag, size = 0x8, scoped, tag = 'scoped memory for tpu_custom_call.1']
    #allocation6 [shape = 'u8[294912]{0}', space=vmem, size = 0x48000, scoped, tag = 'input window, operand 3, single buffered']
    #allocation7 [shape = 's32[1]{0}', space=sflag, size = 0x4, scoped, tag = 'scoped memory for tpu_custom_call.1']
    #allocation8 [shape = 'u8[32768]{0}', space=vmem, size = 0x8000, scoped, tag = 'input window, operand 7, single buffered']
    #allocation9 [shape = 'u8[32768]{0}', space=vmem, size = 0x8000, scoped, tag = 'input window, operand 9, single buffered']
    #allocation10 [shape = 's32[1]{0}', space=sflag, size = 0x4, scoped, tag = 'scoped memory for tpu_custom_call.1']
    #allocation11 [shape = 'u8[16384]{0}', space=vmem, size = 0x4000, scoped, tag = 'output window, operand 0']
    %16 = vsyncpa [#allocation4], 0
    %17 = vsyncpa [#allocation7], 0
    %18 = vsyncpa [#allocation10], 0
    %19 = vsyncpa [#allocation5], 0
    %s20 = scalar_lea.sflag [#allocation5], 1
    %21 = vsyncpa %s20, 0
    loop: start=0, step=1, limit=4
    $region2: #{tpu_custom_call.1} parent=1 // loop_pre_header
      _
    $region3: #{tpu_custom_call.1} parent=1 // loop_header
      %s23 = sphi 0, %s27
      %p24 = scmp.ge.s32.totalorder %s23, 4
      %s33 = sphi 0, %s35
      %s36 = sphi 0, %s33
      %s37 = sphi 0, %s36
      %s53 = sphi 0, %s37
      %s57 = sphi 0, %s57
      %s59 = sphi 0, %s57
      %s60 = sphi 0, %s59
      %s74 = sphi 0, %s60
      %s78 = sphi 0, %s78
      %s80 = sphi 0, %s78
      %s81 = sphi 0, %s80
      %s95 = sphi 0, %s81
      %s99 = sphi 0, %s99
      %s101 = sphi 0, %s99
      %s102 = sphi 0, %s101
      %s116 = sphi 0, %s102
      %s120 = sphi 0, %s120
      %s122 = sphi 0, %s120
      %s123 = sphi 0, %s122
      %s137 = sphi 0, %s123
      %s141 = sphi 0, %s141
      %s143 = sphi 0, %s141
      %s144 = sphi 0, %s143
      %s158 = sphi 0, %s144
      %s162 = sphi 0, %s162
      %s164 = sphi 0, %s162
      %s165 = sphi 0, %s164
      %s179 = sphi 0, %s165
      %s183 = sphi 0, %s183
      %s185 = sphi 0, %s183
      %s186 = sphi 0, %s185
      %s200 = sphi 0, %s186
      %s204 = sphi 0, %s204
      %s206 = sphi 0, %s204
      %s207 = sphi 0, %s206
      %s221 = sphi 0, %s207
      %s225 = sphi 0, %s225
      %s227 = sphi 0, %s225
      %s228 = sphi 0, %s227
      %s242 = sphi 0, %s228
      %s246 = sphi 0, %s246
      %s248 = sphi 0, %s246
      %s249 = sphi 0, %s248
      %s263 = sphi 0, %s249
      %s269 = sphi 0, %s271
      %s272 = sphi 0, %s269
      %s273 = sphi 0, %s272
      %s289 = sphi 0, %s273
    $region4: #{tpu_custom_call.1} parent=1 // loop_header_branch
      %26 = sbr.rel (%p24) target = $region8
    $region5: #{tpu_custom_call.1} parent=1 // loop_body
      %s28 = ssub.s32 %s23, 1
      %s29 = ssub.s32 %s23, 2
      %s30 = sadd.s32 %s23, 1
      %s31 = ssub.s32 %s23, %s30
      %p32 = scmp.eq.s32.totalorder %s31, 0
      %s34 = sadd.s32 %s33, 1
      %s35 = scalar_select %p32, %s33, %s34
      %p38 = pneg %p32
      %p39 = scmp.eq.s32.totalorder %s23, 1
      %p40 = por %p38, %p39
      %p41 = scmp.ne.s32.totalorder %s33, %s36
      %p42 = scmp.eq.s32.totalorder %s23, 0
      %p43 = por %p41, %p42
      %p44 = scmp.ne.s32.totalorder %s33, %s36
      %p45 = scmp.eq.s32.totalorder %s28, 1
      %p46 = por %p44, %p45
      %p47 = scmp.ne.s32.totalorder %s36, %s37
      %p48 = scmp.eq.s32.totalorder %s28, 0
      %p49 = por %p47, %p48
      %p50 = scmp.ne.s32.totalorder %s36, %s37
      %p51 = scmp.eq.s32.totalorder %s29, 1
      %p52 = por %p50, %p51
      %p54 = scmp.ne.s32.totalorder %s37, %s53
      %p55 = scmp.eq.s32.totalorder %s29, 0
      %p56 = por %p54, %p55
      %s58 = sadd.s32 %s57, 1
      %p61 = scmp.eq.s32.totalorder %s23, 1
      %p62 = scmp.ne.s32.totalorder %s57, %s59
      %p63 = scmp.eq.s32.totalorder %s23, 0
      %p64 = por %p62, %p63
      %p65 = scmp.ne.s32.totalorder %s57, %s59
      %p66 = scmp.eq.s32.totalorder %s28, 1
      %p67 = por %p65, %p66
      %p68 = scmp.ne.s32.totalorder %s59, %s60
      %p69 = scmp.eq.s32.totalorder %s28, 0
      %p70 = por %p68, %p69
      %p71 = scmp.ne.s32.totalorder %s59, %s60
      %p72 = scmp.eq.s32.totalorder %s29, 1
      %p73 = por %p71, %p72
      %p75 = scmp.ne.s32.totalorder %s60, %s74
      %p76 = scmp.eq.s32.totalorder %s29, 0
      %p77 = por %p75, %p76
      %s79 = sadd.s32 %s78, 1
      %p82 = scmp.eq.s32.totalorder %s23, 1
      %p83 = scmp.ne.s32.totalorder %s78, %s80
      %p84 = scmp.eq.s32.totalorder %s23, 0
      %p85 = por %p83, %p84
      %p86 = scmp.ne.s32.totalorder %s78, %s80
      %p87 = scmp.eq.s32.totalorder %s28, 1
      %p88 = por %p86, %p87
      %p89 = scmp.ne.s32.totalorder %s80, %s81
      %p90 = scmp.eq.s32.totalorder %s28, 0
      %p91 = por %p89, %p90
      %p92 = scmp.ne.s32.totalorder %s80, %s81
      %p93 = scmp.eq.s32.totalorder %s29, 1
      %p94 = por %p92, %p93
      %p96 = scmp.ne.s32.totalorder %s81, %s95
      %p97 = scmp.eq.s32.totalorder %s29, 0
      %p98 = por %p96, %p97
      %s100 = sadd.s32 %s99, 1
      %p103 = scmp.eq.s32.totalorder %s23, 1
      %p104 = scmp.ne.s32.totalorder %s99, %s101
      %p105 = scmp.eq.s32.totalorder %s23, 0
      %p106 = por %p104, %p105
      %p107 = scmp.ne.s32.totalorder %s99, %s101
      %p108 = scmp.eq.s32.totalorder %s28, 1
      %p109 = por %p107, %p108
      %p110 = scmp.ne.s32.totalorder %s101, %s102
      %p111 = scmp.eq.s32.totalorder %s28, 0
      %p112 = por %p110, %p111
      %p113 = scmp.ne.s32.totalorder %s101, %s102
      %p114 = scmp.eq.s32.totalorder %s29, 1
      %p115 = por %p113, %p114
      %p117 = scmp.ne.s32.totalorder %s102, %s116
      %p118 = scmp.eq.s32.totalorder %s29, 0
      %p119 = por %p117, %p118
      %s121 = sadd.s32 %s120, 1
      %p124 = scmp.eq.s32.totalorder %s23, 1
      %p125 = scmp.ne.s32.totalorder %s120, %s122
      %p126 = scmp.eq.s32.totalorder %s23, 0
      %p127 = por %p125, %p126
      %p128 = scmp.ne.s32.totalorder %s120, %s122
      %p129 = scmp.eq.s32.totalorder %s28, 1
      %p130 = por %p128, %p129
      %p131 = scmp.ne.s32.totalorder %s122, %s123
      %p132 = scmp.eq.s32.totalorder %s28, 0
      %p133 = por %p131, %p132
      %p134 = scmp.ne.s32.totalorder %s122, %s123
      %p135 = scmp.eq.s32.totalorder %s29, 1
      %p136 = por %p134, %p135
      %p138 = scmp.ne.s32.totalorder %s123, %s137
      %p139 = scmp.eq.s32.totalorder %s29, 0
      %p140 = por %p138, %p139
      %s142 = sadd.s32 %s141, 1
      %p145 = scmp.eq.s32.totalorder %s23, 1
      %p146 = scmp.ne.s32.totalorder %s141, %s143
      %p147 = scmp.eq.s32.totalorder %s23, 0
      %p148 = por %p146, %p147
      %p149 = scmp.ne.s32.totalorder %s141, %s143
      %p150 = scmp.eq.s32.totalorder %s28, 1
      %p151 = por %p149, %p150
      %p152 = scmp.ne.s32.totalorder %s143, %s144
      %p153 = scmp.eq.s32.totalorder %s28, 0
      %p154 = por %p152, %p153
      %p155 = scmp.ne.s32.totalorder %s143, %s144
      %p156 = scmp.eq.s32.totalorder %s29, 1
      %p157 = por %p155, %p156
      %p159 = scmp.ne.s32.totalorder %s144, %s158
      %p160 = scmp.eq.s32.totalorder %s29, 0
      %p161 = por %p159, %p160
      %s163 = sadd.s32 %s162, 1
      %p166 = scmp.eq.s32.totalorder %s23, 1
      %p167 = scmp.ne.s32.totalorder %s162, %s164
      %p168 = scmp.eq.s32.totalorder %s23, 0
      %p169 = por %p167, %p168
      %p170 = scmp.ne.s32.totalorder %s162, %s164
      %p171 = scmp.eq.s32.totalorder %s28, 1
      %p172 = por %p170, %p171
      %p173 = scmp.ne.s32.totalorder %s164, %s165
      %p174 = scmp.eq.s32.totalorder %s28, 0
      %p175 = por %p173, %p174
      %p176 = scmp.ne.s32.totalorder %s164, %s165
      %p177 = scmp.eq.s32.totalorder %s29, 1
      %p178 = por %p176, %p177
      %p180 = scmp.ne.s32.totalorder %s165, %s179
      %p181 = scmp.eq.s32.totalorder %s29, 0
      %p182 = por %p180, %p181
      %s184 = sadd.s32 %s183, 1
      %p187 = scmp.eq.s32.totalorder %s23, 1
      %p188 = scmp.ne.s32.totalorder %s183, %s185
      %p189 = scmp.eq.s32.totalorder %s23, 0
      %p190 = por %p188, %p189
      %p191 = scmp.ne.s32.totalorder %s183, %s185
      %p192 = scmp.eq.s32.totalorder %s28, 1
      %p193 = por %p191, %p192
      %p194 = scmp.ne.s32.totalorder %s185, %s186
      %p195 = scmp.eq.s32.totalorder %s28, 0
      %p196 = por %p194, %p195
      %p197 = scmp.ne.s32.totalorder %s185, %s186
      %p198 = scmp.eq.s32.totalorder %s29, 1
      %p199 = por %p197, %p198
      %p201 = scmp.ne.s32.totalorder %s186, %s200
      %p202 = scmp.eq.s32.totalorder %s29, 0
      %p203 = por %p201, %p202
      %s205 = sadd.s32 %s204, 1
      %p208 = scmp.eq.s32.totalorder %s23, 1
      %p209 = scmp.ne.s32.totalorder %s204, %s206
      %p210 = scmp.eq.s32.totalorder %s23, 0
      %p211 = por %p209, %p210
      %p212 = scmp.ne.s32.totalorder %s204, %s206
      %p213 = scmp.eq.s32.totalorder %s28, 1
      %p214 = por %p212, %p213
      %p215 = scmp.ne.s32.totalorder %s206, %s207
      %p216 = scmp.eq.s32.totalorder %s28, 0
      %p217 = por %p215, %p216
      %p218 = scmp.ne.s32.totalorder %s206, %s207
      %p219 = scmp.eq.s32.totalorder %s29, 1
      %p220 = por %p218, %p219
      %p222 = scmp.ne.s32.totalorder %s207, %s221
      %p223 = scmp.eq.s32.totalorder %s29, 0
      %p224 = por %p222, %p223
      %s226 = sadd.s32 %s225, 1
      %p229 = scmp.eq.s32.totalorder %s23, 1
      %p230 = scmp.ne.s32.totalorder %s225, %s227
      %p231 = scmp.eq.s32.totalorder %s23, 0
      %p232 = por %p230, %p231
      %p233 = scmp.ne.s32.totalorder %s225, %s227
      %p234 = scmp.eq.s32.totalorder %s28, 1
      %p235 = por %p233, %p234
      %p236 = scmp.ne.s32.totalorder %s227, %s228
      %p237 = scmp.eq.s32.totalorder %s28, 0
      %p238 = por %p236, %p237
      %p239 = scmp.ne.s32.totalorder %s227, %s228
      %p240 = scmp.eq.s32.totalorder %s29, 1
      %p241 = por %p239, %p240
      %p243 = scmp.ne.s32.totalorder %s228, %s242
      %p244 = scmp.eq.s32.totalorder %s29, 0
      %p245 = por %p243, %p244
      %s247 = sadd.s32 %s246, 1
      %p250 = scmp.eq.s32.totalorder %s23, 1
      %p251 = scmp.ne.s32.totalorder %s246, %s248
      %p252 = scmp.eq.s32.totalorder %s23, 0
      %p253 = por %p251, %p252
      %p254 = scmp.ne.s32.totalorder %s246, %s248
      %p255 = scmp.eq.s32.totalorder %s28, 1
      %p256 = por %p254, %p255
      %p257 = scmp.ne.s32.totalorder %s248, %s249
      %p258 = scmp.eq.s32.totalorder %s28, 0
      %p259 = por %p257, %p258
      %p260 = scmp.ne.s32.totalorder %s248, %s249
      %p261 = scmp.eq.s32.totalorder %s29, 1
      %p262 = por %p260, %p261
      %p264 = scmp.ne.s32.totalorder %s249, %s263
      %p265 = scmp.eq.s32.totalorder %s29, 0
      %p266 = por %p264, %p265
      %s267 = ssub.s32 %s23, %s30
      %p268 = scmp.eq.s32.totalorder %s267, 0
      %s270 = sadd.s32 %s269, 1
      %s271 = scalar_select %p268, %s269, %s270
      %p274 = pneg %p268
      %p275 = scmp.eq.s32.totalorder %s23, 1
      %p276 = por %p274, %p275
      %p277 = scmp.ne.s32.totalorder %s269, %s272
      %p278 = scmp.eq.s32.totalorder %s23, 0
      %p279 = por %p277, %p278
      %p280 = scmp.ne.s32.totalorder %s269, %s272
      %p281 = scmp.eq.s32.totalorder %s28, 1
      %p282 = por %p280, %p281
      %p283 = scmp.ne.s32.totalorder %s272, %s273
      %p284 = scmp.eq.s32.totalorder %s28, 0
      %p285 = por %p283, %p284
      %p286 = scmp.ne.s32.totalorder %s272, %s273
      %p287 = scmp.eq.s32.totalorder %s29, 1
      %p288 = por %p286, %p287
      %p290 = scmp.ne.s32.totalorder %s273, %s289
      %p291 = scmp.eq.s32.totalorder %s29, 0
      %p292 = por %p290, %p291
      %p293 = scmp.le.s32.totalorder 1, %s23
      %p294 = scmp.lt.s32.totalorder %s23, 3
      %p295 = pnand %p293, %p294
      %p296 = pneg %p295
      // Predicated region
      $region9: #{tpu_custom_call.1} parent=5 // pred_check
        _
      $region10: #{tpu_custom_call.1} parent=5 // pred_check_branch
        %298 = sbr.rel (%p295) target = $region12
      $region11: #{tpu_custom_call.1} parent=5 // pred_region
        %s299 = ssub.s32 %s23, 1
        // Predicated region
        $region13: #{tpu_custom_call.1} parent=11 // pred_check
          %p300 = pneg %p70
        $region14: #{tpu_custom_call.1} parent=11 // pred_check_branch
          %302 = sbr.rel (%p300) target = $region16
        $region15: #{tpu_custom_call.1} parent=11 // pred_region
          %s304 = ssub.s32 128, 128
          %305 = vsyncadd [#allocation4], %s304
          %s306 = sshll.u32 [#allocation3], 4
          %s307 = int_to_ptr.vmem [resolvable:$true] %s306
          %312 = dma.hbm_to_vmem [thread:$0]  %s1, 128, %s307, [#allocation4], 64, 64, 4
        $region16: #{tpu_custom_call.1} parent=11 // pred_fallthru
          _
        // Predicated region
        $region17: #{tpu_custom_call.1} parent=11 // pred_check
          %p313 = pneg %p91
        $region18: #{tpu_custom_call.1} parent=11 // pred_check_branch
          %315 = sbr.rel (%p313) target = $region20
        $region19: #{tpu_custom_call.1} parent=11 // pred_region
          _
        $region20: #{tpu_custom_call.1} parent=11 // pred_fallthru
          _
        // Predicated region
        $region21: #{tpu_custom_call.1} parent=11 // pred_check
          %p316 = pneg %p112
        $region22: #{tpu_custom_call.1} parent=11 // pred_check_branch
          %318 = sbr.rel (%p316) target = $region24
        $region23: #{tpu_custom_call.1} parent=11 // pred_region
          %s320 = ssub.s32 9216, 9216
          %321 = vsyncadd [#allocation7], %s320
          %s322 = sshll.u32 [#allocation6], 4
          %s323 = int_to_ptr.vmem [resolvable:$true] %s322
          %328 = dma.hbm_to_vmem [thread:$0]  %s3, 9216, %s323, [#allocation7], 64, 64, 4
        $region24: #{tpu_custom_call.1} parent=11 // pred_fallthru
          _
        // Predicated region
        $region25: #{tpu_custom_call.1} parent=11 // pred_check
          %p329 = pneg %p133
        $region26: #{tpu_custom_call.1} parent=11 // pred_check_branch
          %331 = sbr.rel (%p329) target = $region28
        $region27: #{tpu_custom_call.1} parent=11 // pred_region
          _
        $region28: #{tpu_custom_call.1} parent=11 // pred_fallthru
          _
        // Predicated region
        $region29: #{tpu_custom_call.1} parent=11 // pred_check
          %p332 = pneg %p154
        $region30: #{tpu_custom_call.1} parent=11 // pred_check_branch
          %334 = sbr.rel (%p332) target = $region32
        $region31: #{tpu_custom_call.1} parent=11 // pred_region
          _
        $region32: #{tpu_custom_call.1} parent=11 // pred_fallthru
          _
        // Predicated region
        $region33: #{tpu_custom_call.1} parent=11 // pred_check
          %p335 = pneg %p175
        $region34: #{tpu_custom_call.1} parent=11 // pred_check_branch
          %337 = sbr.rel (%p335) target = $region36
        $region35: #{tpu_custom_call.1} parent=11 // pred_region
          _
        $region36: #{tpu_custom_call.1} parent=11 // pred_fallthru
          _
        // Predicated region
        $region37: #{tpu_custom_call.1} parent=11 // pred_check
          %p338 = pneg %p196
        $region38: #{tpu_custom_call.1} parent=11 // pred_check_branch
          %340 = sbr.rel (%p338) target = $region40
        $region39: #{tpu_custom_call.1} parent=11 // pred_region
          %s342 = ssub.s32 1024, 1024
          %343 = vsyncadd [#allocation7], %s342
          %s344 = sshll.u32 [#allocation8], 4
          %s345 = int_to_ptr.vmem [resolvable:$true] %s344
          %350 = dma.hbm_to_vmem [thread:$0]  %s7, 1024, %s345, [#allocation7], 64, 64, 4
        $region40: #{tpu_custom_call.1} parent=11 // pred_fallthru
          _
        // Predicated region
        $region41: #{tpu_custom_call.1} parent=11 // pred_check
          %p351 = pneg %p217
        $region42: #{tpu_custom_call.1} parent=11 // pred_check_branch
          %353 = sbr.rel (%p351) target = $region44
        $region43: #{tpu_custom_call.1} parent=11 // pred_region
          _
        $region44: #{tpu_custom_call.1} parent=11 // pred_fallthru
          _
        // Predicated region
        $region45: #{tpu_custom_call.1} parent=11 // pred_check
          %p354 = pneg %p238
        $region46: #{tpu_custom_call.1} parent=11 // pred_check_branch
          %356 = sbr.rel (%p354) target = $region48
        $region47: #{tpu_custom_call.1} parent=11 // pred_region
          %s358 = ssub.s32 1024, 1024
          %359 = vsyncadd [#allocation10], %s358
          %s360 = sshll.u32 [#allocation9], 4
          %s361 = int_to_ptr.vmem [resolvable:$true] %s360
          %366 = dma.hbm_to_vmem [thread:$0]  %s9, 1024, %s361, [#allocation10], 64, 64, 4
        $region48: #{tpu_custom_call.1} parent=11 // pred_fallthru
          _
        // Predicated region
        $region49: #{tpu_custom_call.1} parent=11 // pred_check
          %p367 = pneg %p259
        $region50: #{tpu_custom_call.1} parent=11 // pred_check_branch
          %369 = sbr.rel (%p367) target = $region52
        $region51: #{tpu_custom_call.1} parent=11 // pred_region
          _
        $region52: #{tpu_custom_call.1} parent=11 // pred_fallthru
          _
      $region12: #{tpu_custom_call.1} parent=5 // pred_fallthru
        _
      %p370 = scmp.lt.s32.totalorder %s23, 2
      // Predicated region
      $region53: #{tpu_custom_call.1} parent=5 // pred_check
        %p371 = pneg %p370
      $region54: #{tpu_custom_call.1} parent=5 // pred_check_branch
        %373 = sbr.rel (%p371) target = $region56
      $region55: #{tpu_custom_call.1} parent=5 // pred_region
        // Predicated region
        $region57: #{tpu_custom_call.1} parent=55 // pred_check
          %p374 = pneg %p43
        $region58: #{tpu_custom_call.1} parent=55 // pred_check_branch
          %376 = sbr.rel (%p374) target = $region60
        $region59: #{tpu_custom_call.1} parent=55 // pred_region
          %s377 = smul.u32 2, %s23
          %p378 = scmp.lt.s32.totalorder %s377, 3
          %s379 = scalar_select %p378, %s377, 3
          %s380 = smul.addr %s379, 8
          %s381 = scalar_lea.vmem %s0, %s380
          %s382 = smul.u32 2, %s23
        $region60: #{tpu_custom_call.1} parent=55 // pred_fallthru
          _
      $region56: #{tpu_custom_call.1} parent=5 // pred_fallthru
        _
      %p383 = scmp.le.s32.totalorder 1, %s23
      %p384 = scmp.lt.s32.totalorder %s23, 3
      %p385 = pnand %p383, %p384
      %p386 = pneg %p385
      // Predicated region
      $region61: #{tpu_custom_call.1} parent=5 // pred_check
        _
      $region62: #{tpu_custom_call.1} parent=5 // pred_check_branch
        %388 = sbr.rel (%p385) target = $region64
      $region63: #{tpu_custom_call.1} parent=5 // pred_region
        %s389 = ssub.s32 %s23, 1
        // Predicated region
        $region65: #{tpu_custom_call.1} parent=63 // pred_check
          %p390 = pneg %p70
        $region66: #{tpu_custom_call.1} parent=63 // pred_check_branch
          %392 = sbr.rel (%p390) target = $region68
        $region67: #{tpu_custom_call.1} parent=63 // pred_region
          %393 = dma.done [#allocation4], 128
        $region68: #{tpu_custom_call.1} parent=63 // pred_fallthru
          _
        // Predicated region
        $region69: #{tpu_custom_call.1} parent=63 // pred_check
          %p394 = pneg %p112
        $region70: #{tpu_custom_call.1} parent=63 // pred_check_branch
          %396 = sbr.rel (%p394) target = $region72
        $region71: #{tpu_custom_call.1} parent=63 // pred_region
          %397 = dma.done [#allocation7], 9216
        $region72: #{tpu_custom_call.1} parent=63 // pred_fallthru
          _
        // Predicated region
        $region73: #{tpu_custom_call.1} parent=63 // pred_check
          %p398 = pneg %p196
        $region74: #{tpu_custom_call.1} parent=63 // pred_check_branch
          %400 = sbr.rel (%p398) target = $region76
        $region75: #{tpu_custom_call.1} parent=63 // pred_region
          %401 = dma.done [#allocation7], 1024
        $region76: #{tpu_custom_call.1} parent=63 // pred_fallthru
          _
        // Predicated region
        $region77: #{tpu_custom_call.1} parent=63 // pred_check
          %p402 = pneg %p238
        $region78: #{tpu_custom_call.1} parent=63 // pred_check_branch
          %404 = sbr.rel (%p402) target = $region80
        $region79: #{tpu_custom_call.1} parent=63 // pred_region
          %405 = dma.done [#allocation10], 1024
        $region80: #{tpu_custom_call.1} parent=63 // pred_fallthru
          _
        %s406 = smul.u32 2, %s28
        %p407 = scmp.lt.s32.totalorder %s406, 3
        %s408 = scalar_select %p407, %s406, 3
        %s409 = smul.addr %s408, 8
        %s410 = scalar_lea.vmem %s0, %s409
        %p411 = pneg %p49
        %p412 = pneg %p46
        %p413 = pneg %p70
        %p414 = pneg %p67
        %p415 = pneg %p91
        %p416 = pneg %p88
        %p417 = pneg %p112
        %p418 = pneg %p109
        %p419 = pneg %p133
        %p420 = pneg %p130
        %p421 = pneg %p154
        %p422 = pneg %p151
        %p423 = pneg %p175
        %p424 = pneg %p172
        %p425 = pneg %p196
        %p426 = pneg %p193
        %p427 = pneg %p217
        %p428 = pneg %p214
        %p429 = pneg %p238
        %p430 = pneg %p235
        %p431 = pneg %p259
        %p432 = pneg %p256
        %p433 = pneg %p285
        %p434 = pneg %p282
        %s435 = sand.u32 %s272, 1
        %s436 = scalar_lea.sflag [#allocation5], %s435
        %s437 = sand.u32 %s272, 1
        %s438 = smul.addr %s437, 16
        %s439 = scalar_lea.vmem [#allocation11], %s438
        %s440 = smul.u32 2, %s28
        %p441 = scmp.lt.s32.totalorder %s440, 3
        %s442 = scalar_select %p441, %s440, 3
        %s443 = smul.addr %s442, 8
        %s444 = scalar_lea.vmem %s0, %s443
        %s445 = smul.u32 2, %s28
        %s446 = smul.u32 2, %s28
        %v448 = vld [vmem:[%s444] sm:$0xff]
        %v449 = vld [vmem:[%s444 + $0x8] sm:$0xff]
        %v450 = vpack.c.bf16 %v449, %v448
        %v451 = vld [vmem:[#allocation3] sm:$0xf]
        %v452 = vld [vmem:[#allocation3 + $0x4] sm:$0xf]
        %v453 = vld [vmem:[%s2] sm:$0x1]
        %v455 = vlaneseq
        %v456 = vshrl.u32 %v455, 7
        %v457 = vsub.s32 0, %v456
        %v458 = vrot.slane %v453, %v457
        %v462 = vunpack.c.l.b16 %v451
        %v463 = vunpack.c.l.b16 %v452
        %v464 = vpack.c.b16 %v463, %v462
        %vm466 = vcmask 130048
        %v468 = vsel %vm466, %v450, 0
        %470 = vmatprep.subr.bf16.mxu0 0
        %471 = vmatpush1.bf16.msra.mxu0 %v464
        %472 = vmatprep.subr.bf16.mxu0 0
        %473 = vmatpush1.bf16.msra.mxu0 0
        %474 = vmatprep.subr.bf16.mxu0 0
        %475 = vmatpush1.bf16.msra.mxu0 0
        %476 = vmatprep.subr.bf16.mxu0 0
        %477 = vmatpush1.bf16.msra.mxu0 0
        %478 = vmatprep.subr.bf16.mxu0 0
        %479 = vmatpush1.bf16.msra.mxu0 0
        %480 = vmatprep.subr.bf16.mxu0 0
        %481 = vmatpush1.bf16.msra.mxu0 0
        %482 = vmatprep.subr.bf16.mxu0 0
        %483 = vmatpush1.bf16.msra.mxu0 0
        %484 = vmatprep.subr.bf16.mxu0 0
        %485 = vmatpush1.bf16.msra.mxu0 0
        %486 = vmatprep.subr.bf16.mxu0 0
        %487 = vmatpush1.bf16.msra.mxu0 0
        %488 = vmatprep.subr.bf16.mxu0 0
        %489 = vmatpush1.bf16.msra.mxu0 0
        %490 = vmatprep.subr.bf16.mxu0 0
        %491 = vmatpush1.bf16.msra.mxu0 0
        %492 = vmatprep.subr.bf16.mxu0 0
        %493 = vmatpush1.bf16.msra.mxu0 0
        %494 = vmatprep.subr.bf16.mxu0 0
        %495 = vmatpush1.bf16.msra.mxu0 0
        %496 = vmatprep.subr.bf16.mxu0 0
        %497 = vmatpush1.bf16.msra.mxu0 0
        %498 = vmatprep.subr.bf16.mxu0 0
        %499 = vmatpush1.bf16.msra.mxu0 0
        %500 = vmatprep.subr.bf16.mxu0 0
        %501 = vmatpush1.bf16.msra.mxu0 0
        %502 = vmatprep.mubr.bf16.mxu0 0
        %503 = vmatmul.mubr.bf16.gmra.mrb[0].mxu0 %v468
        %v504 = vpop.f32.mrb[0].mxu0
        %v505 = vadd.f32 %v458, %v504
        %v506 = vpop.f32.mrb[0].mxu0
        %v507 = vpop.f32.mrb[0].mxu0
        %v508 = vadd.f32 %v458, %v507
        %v509 = vpop.f32.mrb[0].mxu0
        %510 = vdwg.mxu0
        %v511 = vmax.f32 %v505, 0.0
        %v512 = vmax.f32 %v508, 0.0
        %513 = vst [vmem:[#allocation2] sm:$0x7] 0
        %s514 = scalar_lea.vmem [#allocation2], 20
        %515 = vst [vmem:[%s514] sm:$0x7] 0
        %s516 = scalar_lea.vmem [#allocation2], 4
        %vm517 = vcmask 1040384
        %vm518 = vsmask.f32 256
        %vm519 = vmand %vm517, %vm518
        %v520 = vld [vmem:[%s516] sm:$0x1]
        %v521 = vsel %vm519, 0, %v520
        %522 = vst [vmem:[%s516] sm:$0x1] %v521
        %v523 = vld [vmem:[%s516 + $0x4] sm:$0x1]
        %v524 = vsel %vm519, 0, %v523
        %525 = vst [vmem:[%s516 + $0x4] sm:$0x1] %v524
        %v526 = vld [vmem:[%s516 + $0x8] sm:$0x1]
        %v527 = vsel %vm519, 0, %v526
        %528 = vst [vmem:[%s516 + $0x8] sm:$0x1] %v527
        %v529 = vld [vmem:[%s516 + $0xc] sm:$0x1]
        %v530 = vsel %vm519, 0, %v529
        %531 = vst [vmem:[%s516 + $0xc] sm:$0x1] %v530
        %vm532 = vcmask 1042434
        %vm533 = vsmask.f32 7946
        %vm534 = vmand %vm532, %vm533
        %v535 = vld [vmem:[%s516] sm:$0x4]
        %v536 = vsel %vm534, 0, %v535
        %537 = vst [vmem:[%s516] sm:$0x4] %v536
        %v538 = vld [vmem:[%s516 + $0x4] sm:$0x4]
        %v539 = vsel %vm534, 0, %v538
        %540 = vst [vmem:[%s516 + $0x4] sm:$0x4] %v539
        %v541 = vld [vmem:[%s516 + $0x8] sm:$0x4]
        %v542 = vsel %vm534, 0, %v541
        %543 = vst [vmem:[%s516 + $0x8] sm:$0x4] %v542
        %v544 = vld [vmem:[%s516 + $0xc] sm:$0x4]
        %v545 = vsel %vm534, 0, %v544
        %546 = vst [vmem:[%s516 + $0xc] sm:$0x4] %v545
        %v547 = vpack.c.bf16 %v512, %v511
        %v549 = vcombine.high %v547, %v547
        %v551 = vunpack.c.l.s4 1983009808
        %v552 = vunpack.c.0.s8 %v551
        %v553 = vlaneseq
        %v554 = vshrl.u32 %v553, 7
        %v555 = vsub.s32 %v552, %v554
        %v556 = vrot.slane %v547, %v555
        %v558 = vunpack.c.l.s4 1983009808
        %v559 = vunpack.c.0.s8 %v558
        %v560 = vlaneseq
        %v561 = vshrl.u32 %v560, 7
        %v562 = vsub.s32 %v559, %v561
        %v563 = vrot.slane %v549, %v562
        %v564 = vcombine.high %v556, %v556
        %v565 = vcombine.high %v563, %v563
        %v567 = vunpack.c.l.s4 1983009808
        %v568 = vunpack.c.0.s8 %v567
        %v569 = vlaneseq
        %v570 = vshrl.u32 %v569, 7
        %v571 = vsub.s32 %v568, %v570
        %v572 = vrot.slane %v556, %v571
        %v574 = vunpack.c.l.s4 1983009808
        %v575 = vunpack.c.0.s8 %v574
        %v576 = vlaneseq
        %v577 = vshrl.u32 %v576, 7
        %v578 = vsub.s32 %v575, %v577
        %v579 = vrot.slane %v564, %v578
        %v581 = vunpack.c.l.s4 1983009808
        %v582 = vunpack.c.0.s8 %v581
        %v583 = vlaneseq
        %v584 = vshrl.u32 %v583, 7
        %v585 = vsub.s32 %v582, %v584
        %v586 = vrot.slane %v563, %v585
        %v588 = vunpack.c.l.s4 1983009808
        %v589 = vunpack.c.0.s8 %v588
        %v590 = vlaneseq
        %v591 = vshrl.u32 %v590, 7
        %v592 = vsub.s32 %v589, %v591
        %v593 = vrot.slane %v565, %v592
        %v595 = vshrl.u32 %v572, 16
        %v597 = vrot.slane %v595, 7
        %v598 = vshll.u32 %v572, 16
        %v600 = vor.u32 %v597, %v598
        %v602 = vshrl.u32 %v579, 16
        %v604 = vrot.slane %v602, 7
        %v605 = vshll.u32 %v579, 16
        %v607 = vor.u32 %v604, %v605
        %v609 = vshrl.u32 %v586, 16
        %v611 = vrot.slane %v609, 7
        %v612 = vshll.u32 %v586, 16
        %v614 = vor.u32 %v611, %v612
        %v616 = vshrl.u32 %v593, 16
        %v618 = vrot.slane %v616, 7
        %v619 = vshll.u32 %v593, 16
        %v621 = vor.u32 %v618, %v619
        %vm626 = vcmask 1042432
        %vm627 = vsmask.f32 2306
        %vm628 = vmand %vm626, %vm627
        %v629 = vld [vmem:[%s516] sm:$0x7]
        %v630 = vsel %vm628, %v600, %v629
        %631 = vst [vmem:[%s516] sm:$0x7] %v630
        %v632 = vld [vmem:[%s516 + $0x4] sm:$0x7]
        %v633 = vsel %vm628, %v607, %v632
        %634 = vst [vmem:[%s516 + $0x4] sm:$0x7] %v633
        %v635 = vld [vmem:[%s516 + $0x8] sm:$0x7]
        %v636 = vsel %vm628, %v614, %v635
        %637 = vst [vmem:[%s516 + $0x8] sm:$0x7] %v636
        %v638 = vld [vmem:[%s516 + $0xc] sm:$0x7]
        %v639 = vsel %vm628, %v621, %v638
        %640 = vst [vmem:[%s516 + $0xc] sm:$0x7] %v639
        %v641 = vld [vmem:[#allocation2] sm:$0x3]
        %v642 = vld [vmem:[#allocation2 + $0x4] sm:$0x3]
        %v643 = vld [vmem:[#allocation2 + $0x8] sm:$0x3]
        %v644 = vld [vmem:[#allocation2 + $0xc] sm:$0x3]
        %v645 = vld [vmem:[#allocation6] sm:$0xf]
        %v646 = vld [vmem:[#allocation6 + $0x4] sm:$0xf]
        %v647 = vld [vmem:[#allocation6 + $0x8] sm:$0xf]
        %v648 = vld [vmem:[#allocation6 + $0xc] sm:$0xf]
        %v649 = vld [vmem:[#allocation6 + $0x10] sm:$0xf]
        %v650 = vld [vmem:[#allocation6 + $0x14] sm:$0xf]
        %v651 = vld [vmem:[#allocation6 + $0x18] sm:$0xf]
        %v652 = vld [vmem:[#allocation6 + $0x1c] sm:$0xf]
        %v653 = vld [vmem:[#allocation6 + $0x20] sm:$0xf]
        %v654 = vld [vmem:[#allocation6 + $0x24] sm:$0xf]
        %v655 = vld [vmem:[#allocation6 + $0x28] sm:$0xf]
        %v656 = vld [vmem:[#allocation6 + $0x2c] sm:$0xf]
        %v657 = vld [vmem:[#allocation6 + $0x30] sm:$0xf]
        %v658 = vld [vmem:[#allocation6 + $0x34] sm:$0xf]
        %v659 = vld [vmem:[#allocation6 + $0x38] sm:$0xf]
        %v660 = vld [vmem:[#allocation6 + $0x3c] sm:$0xf]
        %v661 = vld [vmem:[#allocation2] sm:$0x7]
        %v662 = vld [vmem:[#allocation2 + $0x4] sm:$0x7]
        %v663 = vld [vmem:[#allocation2 + $0x8] sm:$0x7]
        %v664 = vld [vmem:[#allocation2 + $0xc] sm:$0x7]
        %v670 = vunpack.c.l.s4 1983009808
        %v671 = vunpack.c.0.s8 %v670
        %v672 = vlaneseq
        %v673 = vshrl.u32 %v672, 7
        %v674 = vsub.s32 %v671, %v673
        %v675 = vrot.slane %v661, %v674
        %v676 = vcombine.high %v675, %v675
        %v678 = vunpack.c.l.s4 1983009808
        %v679 = vunpack.c.0.s8 %v678
        %v680 = vlaneseq
        %v681 = vshrl.u32 %v680, 7
        %v682 = vsub.s32 %v679, %v681
        %v683 = vrot.slane %v662, %v682
        %v684 = vcombine.high %v683, %v683
        %v686 = vunpack.c.l.s4 1983009808
        %v687 = vunpack.c.0.s8 %v686
        %v688 = vlaneseq
        %v689 = vshrl.u32 %v688, 7
        %v690 = vsub.s32 %v687, %v689
        %v691 = vrot.slane %v663, %v690
        %v692 = vcombine.high %v691, %v691
        %v694 = vunpack.c.l.s4 1983009808
        %v695 = vunpack.c.0.s8 %v694
        %v696 = vlaneseq
        %v697 = vshrl.u32 %v696, 7
        %v698 = vsub.s32 %v695, %v697
        %v699 = vrot.slane %v664, %v698
        %v700 = vcombine.high %v699, %v699
        %vm701 = vsmask.f32 1280
        %vm702 = vsmask.f32 3336
        %vm703 = vmor %vm701, %vm702
        %vm704 = vsmask.f32 5392
        %vm705 = vmor %vm703, %vm704
        %vm706 = vsmask.f32 7448
        %vm707 = vmor %vm705, %vm706
        %v709 = vshrl.u32 %v675, 16
        %v711 = vrot.slane %v709, 6
        %v712 = vshll.u32 %v675, 16
        %v714 = vrot.slane %v712, 7
        %v715 = vor.u32 %v711, %v714
        %v716 = vrot.slane %v715, 2
        %v718 = vshll.u32 %v676, 16
        %v720 = vrot.slane %v718, 7
        %v721 = vsel %vm707, %v716, %v720
        %v723 = vshrl.u32 %v683, 16
        %v725 = vrot.slane %v723, 6
        %v726 = vshll.u32 %v683, 16
        %v728 = vrot.slane %v726, 7
        %v729 = vor.u32 %v725, %v728
        %v730 = vrot.slane %v729, 2
        %v732 = vshll.u32 %v684, 16
        %v734 = vrot.slane %v732, 7
        %v735 = vsel %vm707, %v730, %v734
        %v737 = vshrl.u32 %v691, 16
        %v739 = vrot.slane %v737, 6
        %v740 = vshll.u32 %v691, 16
        %v742 = vrot.slane %v740, 7
        %v743 = vor.u32 %v739, %v742
        %v744 = vrot.slane %v743, 2
        %v746 = vshll.u32 %v692, 16
        %v748 = vrot.slane %v746, 7
        %v749 = vsel %vm707, %v744, %v748
        %v751 = vshrl.u32 %v699, 16
        %v753 = vrot.slane %v751, 6
        %v754 = vshll.u32 %v699, 16
        %v756 = vrot.slane %v754, 7
        %v757 = vor.u32 %v753, %v756
        %v758 = vrot.slane %v757, 2
        %v760 = vshll.u32 %v700, 16
        %v762 = vrot.slane %v760, 7
        %v763 = vsel %vm707, %v758, %v762
        %s764 = scalar_lea.vmem [#allocation6], 64
        %v765 = vld [vmem:[%s764] sm:$0xf]
        %v766 = vld [vmem:[%s764 + $0x4] sm:$0xf]
        %v767 = vld [vmem:[%s764 + $0x8] sm:$0xf]
        %v768 = vld [vmem:[%s764 + $0xc] sm:$0xf]
        %v769 = vld [vmem:[%s764 + $0x10] sm:$0xf]
        %v770 = vld [vmem:[%s764 + $0x14] sm:$0xf]
        %v771 = vld [vmem:[%s764 + $0x18] sm:$0xf]
        %v772 = vld [vmem:[%s764 + $0x1c] sm:$0xf]
        %v773 = vld [vmem:[%s764 + $0x20] sm:$0xf]
        %v774 = vld [vmem:[%s764 + $0x24] sm:$0xf]
        %v775 = vld [vmem:[%s764 + $0x28] sm:$0xf]
        %v776 = vld [vmem:[%s764 + $0x2c] sm:$0xf]
        %v777 = vld [vmem:[%s764 + $0x30] sm:$0xf]
        %v778 = vld [vmem:[%s764 + $0x34] sm:$0xf]
        %v779 = vld [vmem:[%s764 + $0x38] sm:$0xf]
        %v780 = vld [vmem:[%s764 + $0x3c] sm:$0xf]
        %v781 = vcombine.low %v721, %v735
        %v782 = vcombine.low %v749, %v763
        %v784 = vunpack.c.l.s4 1983009808
        %v785 = vunpack.c.0.s8 %v784
        %v786 = vlaneseq
        %v787 = vshrl.u32 %v786, 7
        %v788 = vsub.s32 %v785, %v787
        %v789 = vrot.slane %v781, %v788
        %v791 = vunpack.c.l.s4 1983009808
        %v792 = vunpack.c.0.s8 %v791
        %v793 = vlaneseq
        %v794 = vshrl.u32 %v793, 7
        %v795 = vsub.s32 %v792, %v794
        %v796 = vrot.slane %v782, %v795
        %v797 = vcombine.low %v789, %v796
        %v815 = vunpack.c.l.b16 %v765
        %v816 = vunpack.c.l.b16 %v766
        %v817 = vunpack.c.l.b16 %v767
        %v818 = vunpack.c.l.b16 %v768
        %v819 = vunpack.c.l.b16 %v769
        %v820 = vunpack.c.l.b16 %v770
        %v821 = vunpack.c.l.b16 %v771
        %v822 = vunpack.c.l.b16 %v772
        %v823 = vunpack.c.l.b16 %v773
        %v824 = vunpack.c.l.b16 %v774
        %v825 = vunpack.c.l.b16 %v775
        %v826 = vunpack.c.l.b16 %v776
        %v827 = vunpack.c.l.b16 %v777
        %v828 = vunpack.c.l.b16 %v778
        %v829 = vunpack.c.l.b16 %v779
        %v830 = vunpack.c.l.b16 %v780
        %v831 = vpack.c.b16 %v816, %v815
        %v832 = vpack.c.b16 %v818, %v817
        %v833 = vpack.c.b16 %v820, %v819
        %v834 = vpack.c.b16 %v822, %v821
        %v835 = vpack.c.b16 %v824, %v823
        %v836 = vpack.c.b16 %v826, %v825
        %v837 = vpack.c.b16 %v828, %v827
        %v838 = vpack.c.b16 %v830, %v829
        %847 = vmatprep.subr.bf16.mxu0 0
        %848 = vmatpush1.bf16.msra.mxu0 %v831
        %849 = vmatprep.subr.bf16.mxu0 0
        %850 = vmatpush1.bf16.msra.mxu0 %v832
        %851 = vmatprep.subr.bf16.mxu0 0
        %852 = vmatpush1.bf16.msra.mxu0 %v833
        %853 = vmatprep.subr.bf16.mxu0 0
        %854 = vmatpush1.bf16.msra.mxu0 %v834
        %855 = vmatprep.subr.bf16.mxu0 0
        %856 = vmatpush1.bf16.msra.mxu0 %v835
        %857 = vmatprep.subr.bf16.mxu0 0
        %858 = vmatpush1.bf16.msra.mxu0 %v836
        %859 = vmatprep.subr.bf16.mxu0 0
        %860 = vmatpush1.bf16.msra.mxu0 %v837
        %861 = vmatprep.subr.bf16.mxu0 0
        %862 = vmatpush1.bf16.msra.mxu0 %v838
        %863 = vmatprep.subr.bf16.mxu0 0
        %864 = vmatpush1.bf16.msra.mxu0 0
        %865 = vmatprep.subr.bf16.mxu0 0
        %866 = vmatpush1.bf16.msra.mxu0 0
        %867 = vmatprep.subr.bf16.mxu0 0
        %868 = vmatpush1.bf16.msra.mxu0 0
        %869 = vmatprep.subr.bf16.mxu0 0
        %870 = vmatpush1.bf16.msra.mxu0 0
        %871 = vmatprep.subr.bf16.mxu0 0
        %872 = vmatpush1.bf16.msra.mxu0 0
        %873 = vmatprep.subr.bf16.mxu0 0
        %874 = vmatpush1.bf16.msra.mxu0 0
        %875 = vmatprep.subr.bf16.mxu0 0
        %876 = vmatpush1.bf16.msra.mxu0 0
        %877 = vmatprep.subr.bf16.mxu0 0
        %878 = vmatpush1.bf16.msra.mxu0 0
        %879 = vmatprep.mubr.bf16.mxu0 0
        %880 = vmatmul.mubr.bf16.gmra.mrb[0].mxu0 %v797
        %v881 = vpop.f32.mrb[0].mxu0
        %v882 = vadd.f32 0.0, %v881
        %v883 = vpop.f32.mrb[0].mxu0
        %v884 = vpop.f32.mrb[0].mxu0
        %v885 = vadd.f32 0.0, %v884
        %v886 = vpop.f32.mrb[0].mxu0
        %887 = vdwg.mxu0
        %v892 = vcombine.low %v641, %v642
        %v893 = vcombine.low %v643, %v644
        %v895 = vunpack.c.l.s4 1983009808
        %v896 = vunpack.c.0.s8 %v895
        %v897 = vlaneseq
        %v898 = vshrl.u32 %v897, 7
        %v899 = vsub.s32 %v896, %v898
        %v900 = vrot.slane %v892, %v899
        %v902 = vunpack.c.l.s4 1983009808
        %v903 = vunpack.c.0.s8 %v902
        %v904 = vlaneseq
        %v905 = vshrl.u32 %v904, 7
        %v906 = vsub.s32 %v903, %v905
        %v907 = vrot.slane %v893, %v906
        %v908 = vcombine.low %v900, %v907
        %v926 = vunpack.c.l.b16 %v645
        %v927 = vunpack.c.l.b16 %v646
        %v928 = vunpack.c.l.b16 %v647
        %v929 = vunpack.c.l.b16 %v648
        %v930 = vunpack.c.l.b16 %v649
        %v931 = vunpack.c.l.b16 %v650
        %v932 = vunpack.c.l.b16 %v651
        %v933 = vunpack.c.l.b16 %v652
        %v934 = vunpack.c.l.b16 %v653
        %v935 = vunpack.c.l.b16 %v654
        %v936 = vunpack.c.l.b16 %v655
        %v937 = vunpack.c.l.b16 %v656
        %v938 = vunpack.c.l.b16 %v657
        %v939 = vunpack.c.l.b16 %v658
        %v940 = vunpack.c.l.b16 %v659
        %v941 = vunpack.c.l.b16 %v660
        %v942 = vpack.c.b16 %v927, %v926
        %v943 = vpack.c.b16 %v929, %v928
        %v944 = vpack.c.b16 %v931, %v930
        %v945 = vpack.c.b16 %v933, %v932
        %v946 = vpack.c.b16 %v935, %v934
        %v947 = vpack.c.b16 %v937, %v936
        %v948 = vpack.c.b16 %v939, %v938
        %v949 = vpack.c.b16 %v941, %v940
        %958 = vmatprep.subr.bf16.mxu0 0
        %959 = vmatpush1.bf16.msra.mxu0 %v942
        %960 = vmatprep.subr.bf16.mxu0 0
        %961 = vmatpush1.bf16.msra.mxu0 %v943
        %962 = vmatprep.subr.bf16.mxu0 0
        %963 = vmatpush1.bf16.msra.mxu0 %v944
        %964 = vmatprep.subr.bf16.mxu0 0
        %965 = vmatpush1.bf16.msra.mxu0 %v945
        %966 = vmatprep.subr.bf16.mxu0 0
        %967 = vmatpush1.bf16.msra.mxu0 %v946
        %968 = vmatprep.subr.bf16.mxu0 0
        %969 = vmatpush1.bf16.msra.mxu0 %v947
        %970 = vmatprep.subr.bf16.mxu0 0
        %971 = vmatpush1.bf16.msra.mxu0 %v948
        %972 = vmatprep.subr.bf16.mxu0 0
        %973 = vmatpush1.bf16.msra.mxu0 %v949
        %974 = vmatprep.subr.bf16.mxu0 0
        %975 = vmatpush1.bf16.msra.mxu0 0
        %976 = vmatprep.subr.bf16.mxu0 0
        %977 = vmatpush1.bf16.msra.mxu0 0
        %978 = vmatprep.subr.bf16.mxu0 0
        %979 = vmatpush1.bf16.msra.mxu0 0
        %980 = vmatprep.subr.bf16.mxu0 0
        %981 = vmatpush1.bf16.msra.mxu0 0
        %982 = vmatprep.subr.bf16.mxu0 0
        %983 = vmatpush1.bf16.msra.mxu0 0
        %984 = vmatprep.subr.bf16.mxu0 0
        %985 = vmatpush1.bf16.msra.mxu0 0
        %986 = vmatprep.subr.bf16.mxu0 0
        %987 = vmatpush1.bf16.msra.mxu0 0
        %988 = vmatprep.subr.bf16.mxu0 0
        %989 = vmatpush1.bf16.msra.mxu0 0
        %990 = vmatprep.mubr.bf16.mxu0 0
        %991 = vmatmul.mubr.bf16.gmra.mrb[0].mxu0 %v908
        %v992 = vpop.f32.mrb[0].mxu0
        %v993 = vadd.f32 %v882, %v992
        %v994 = vpop.f32.mrb[0].mxu0
        %v995 = vpop.f32.mrb[0].mxu0
        %v996 = vadd.f32 %v885, %v995
        %v997 = vpop.f32.mrb[0].mxu0
        %998 = vdwg.mxu0
        %v999 = vld [vmem:[#allocation2] sm:$0x6]
        %v1000 = vld [vmem:[#allocation2 + $0x4] sm:$0x6]
        %v1001 = vld [vmem:[#allocation2 + $0x8] sm:$0x6]
        %v1002 = vld [vmem:[#allocation2 + $0xc] sm:$0x6]
        %v1008 = vunpack.c.l.s4 1983009808
        %v1009 = vunpack.c.0.s8 %v1008
        %v1010 = vlaneseq
        %v1011 = vshrl.u32 %v1010, 7
        %v1012 = vsub.s32 %v1009, %v1011
        %v1013 = vrot.slane %v999, %v1012
        %v1014 = vcombine.high %v1013, %v1013
        %v1016 = vunpack.c.l.s4 1983009808
        %v1017 = vunpack.c.0.s8 %v1016
        %v1018 = vlaneseq
        %v1019 = vshrl.u32 %v1018, 7
        %v1020 = vsub.s32 %v1017, %v1019
        %v1021 = vrot.slane %v1000, %v1020
        %v1022 = vcombine.high %v1021, %v1021
        %v1024 = vunpack.c.l.s4 1983009808
        %v1025 = vunpack.c.0.s8 %v1024
        %v1026 = vlaneseq
        %v1027 = vshrl.u32 %v1026, 7
        %v1028 = vsub.s32 %v1025, %v1027
        %v1029 = vrot.slane %v1001, %v1028
        %v1030 = vcombine.high %v1029, %v1029
        %v1032 = vunpack.c.l.s4 1983009808
        %v1033 = vunpack.c.0.s8 %v1032
        %v1034 = vlaneseq
        %v1035 = vshrl.u32 %v1034, 7
        %v1036 = vsub.s32 %v1033, %v1035
        %v1037 = vrot.slane %v1002, %v1036
        %v1038 = vcombine.high %v1037, %v1037
        %vm1039 = vmor %vm517, %vm532
        %vm1040 = vcmask 1044484
        %vm1041 = vmor %vm1039, %vm1040
        %vm1042 = vcmask 1046534
        %vm1043 = vmor %vm1041, %vm1042
        %v1044 = vrot.slane %v1013, 7
        %v1045 = vrot.slane %v1044, 2
        %v1046 = vrot.slane %v1014, 7
        %v1047 = vsel %vm1043, %v1045, %v1046
        %v1048 = vrot.slane %v1021, 7
        %v1049 = vrot.slane %v1048, 2
        %v1050 = vrot.slane %v1022, 7
        %v1051 = vsel %vm1043, %v1049, %v1050
        %v1052 = vrot.slane %v1029, 7
        %v1053 = vrot.slane %v1052, 2
        %v1054 = vrot.slane %v1030, 7
        %v1055 = vsel %vm1043, %v1053, %v1054
        %v1056 = vrot.slane %v1037, 7
        %v1057 = vrot.slane %v1056, 2
        %v1058 = vrot.slane %v1038, 7
        %v1059 = vsel %vm1043, %v1057, %v1058
        %s1060 = scalar_lea.vmem [#allocation6], 128
        %v1061 = vld [vmem:[%s1060] sm:$0xf]
        %v1062 = vld [vmem:[%s1060 + $0x4] sm:$0xf]
        %v1063 = vld [vmem:[%s1060 + $0x8] sm:$0xf]
        %v1064 = vld [vmem:[%s1060 + $0xc] sm:$0xf]
        %v1065 = vld [vmem:[%s1060 + $0x10] sm:$0xf]
        %v1066 = vld [vmem:[%s1060 + $0x14] sm:$0xf]
        %v1067 = vld [vmem:[%s1060 + $0x18] sm:$0xf]
        %v1068 = vld [vmem:[%s1060 + $0x1c] sm:$0xf]
        %v1069 = vld [vmem:[%s1060 + $0x20] sm:$0xf]
        %v1070 = vld [vmem:[%s1060 + $0x24] sm:$0xf]
        %v1071 = vld [vmem:[%s1060 + $0x28] sm:$0xf]
        %v1072 = vld [vmem:[%s1060 + $0x2c] sm:$0xf]
        %v1073 = vld [vmem:[%s1060 + $0x30] sm:$0xf]
        %v1074 = vld [vmem:[%s1060 + $0x34] sm:$0xf]
        %v1075 = vld [vmem:[%s1060 + $0x38] sm:$0xf]
        %v1076 = vld [vmem:[%s1060 + $0x3c] sm:$0xf]
        %v1077 = vcombine.low %v1047, %v1051
        %v1078 = vcombine.low %v1055, %v1059
        %v1080 = vunpack.c.l.s4 1983009808
        %v1081 = vunpack.c.0.s8 %v1080
        %v1082 = vlaneseq
        %v1083 = vshrl.u32 %v1082, 7
        %v1084 = vsub.s32 %v1081, %v1083
        %v1085 = vrot.slane %v1077, %v1084
        %v1087 = vunpack.c.l.s4 1983009808
        %v1088 = vunpack.c.0.s8 %v1087
        %v1089 = vlaneseq
        %v1090 = vshrl.u32 %v1089, 7
        %v1091 = vsub.s32 %v1088, %v1090
        %v1092 = vrot.slane %v1078, %v1091
        %v1093 = vcombine.low %v1085, %v1092
        %v1111 = vunpack.c.l.b16 %v1061
        %v1112 = vunpack.c.l.b16 %v1062
        %v1113 = vunpack.c.l.b16 %v1063
        %v1114 = vunpack.c.l.b16 %v1064
        %v1115 = vunpack.c.l.b16 %v1065
        %v1116 = vunpack.c.l.b16 %v1066
        %v1117 = vunpack.c.l.b16 %v1067
        %v1118 = vunpack.c.l.b16 %v1068
        %v1119 = vunpack.c.l.b16 %v1069
        %v1120 = vunpack.c.l.b16 %v1070
        %v1121 = vunpack.c.l.b16 %v1071
        %v1122 = vunpack.c.l.b16 %v1072
        %v1123 = vunpack.c.l.b16 %v1073
        %v1124 = vunpack.c.l.b16 %v1074
        %v1125 = vunpack.c.l.b16 %v1075
        %v1126 = vunpack.c.l.b16 %v1076
        %v1127 = vpack.c.b16 %v1112, %v1111
        %v1128 = vpack.c.b16 %v1114, %v1113
        %v1129 = vpack.c.b16 %v1116, %v1115
        %v1130 = vpack.c.b16 %v1118, %v1117
        %v1131 = vpack.c.b16 %v1120, %v1119
        %v1132 = vpack.c.b16 %v1122, %v1121
        %v1133 = vpack.c.b16 %v1124, %v1123
        %v1134 = vpack.c.b16 %v1126, %v1125
        %1143 = vmatprep.subr.bf16.mxu0 0
        %1144 = vmatpush1.bf16.msra.mxu0 %v1127
        %1145 = vmatprep.subr.bf16.mxu0 0
        %1146 = vmatpush1.bf16.msra.mxu0 %v1128
        %1147 = vmatprep.subr.bf16.mxu0 0
        %1148 = vmatpush1.bf16.msra.mxu0 %v1129
        %1149 = vmatprep.subr.bf16.mxu0 0
        %1150 = vmatpush1.bf16.msra.mxu0 %v1130
        %1151 = vmatprep.subr.bf16.mxu0 0
        %1152 = vmatpush1.bf16.msra.mxu0 %v1131
        %1153 = vmatprep.subr.bf16.mxu0 0
        %1154 = vmatpush1.bf16.msra.mxu0 %v1132
        %1155 = vmatprep.subr.bf16.mxu0 0
        %1156 = vmatpush1.bf16.msra.mxu0 %v1133
        %1157 = vmatprep.subr.bf16.mxu0 0
        %1158 = vmatpush1.bf16.msra.mxu0 %v1134
        %1159 = vmatprep.subr.bf16.mxu0 0
        %1160 = vmatpush1.bf16.msra.mxu0 0
        %1161 = vmatprep.subr.bf16.mxu0 0
        %1162 = vmatpush1.bf16.msra.mxu0 0
        %1163 = vmatprep.subr.bf16.mxu0 0
        %1164 = vmatpush1.bf16.msra.mxu0 0
        %1165 = vmatprep.subr.bf16.mxu0 0
        %1166 = vmatpush1.bf16.msra.mxu0 0
        %1167 = vmatprep.subr.bf16.mxu0 0
        %1168 = vmatpush1.bf16.msra.mxu0 0
        %1169 = vmatprep.subr.bf16.mxu0 0
        %1170 = vmatpush1.bf16.msra.mxu0 0
        %1171 = vmatprep.subr.bf16.mxu0 0
        %1172 = vmatpush1.bf16.msra.mxu0 0
        %1173 = vmatprep.subr.bf16.mxu0 0
        %1174 = vmatpush1.bf16.msra.mxu0 0
        %1175 = vmatprep.mubr.bf16.mxu0 0
        %1176 = vmatmul.mubr.bf16.gmra.mrb[0].mxu0 %v1093
        %v1177 = vpop.f32.mrb[0].mxu0
        %v1178 = vadd.f32 0.0, %v1177
        %v1179 = vpop.f32.mrb[0].mxu0
        %v1180 = vpop.f32.mrb[0].mxu0
        %v1181 = vadd.f32 0.0, %v1180
        %v1182 = vpop.f32.mrb[0].mxu0
        %1183 = vdwg.mxu0
        %v1184 = vadd.f32 %v993, %v1178
        %v1185 = vadd.f32 %v996, %v1181
        %v1186 = vld [vmem:[%s516] sm:$0x3]
        %v1187 = vld [vmem:[%s516 + $0x4] sm:$0x3]
        %v1188 = vld [vmem:[%s516 + $0x8] sm:$0x3]
        %v1189 = vld [vmem:[%s516 + $0xc] sm:$0x3]
        %s1190 = scalar_lea.vmem [#allocation6], 192
        %v1191 = vld [vmem:[%s1190] sm:$0xf]
        %v1192 = vld [vmem:[%s1190 + $0x4] sm:$0xf]
        %v1193 = vld [vmem:[%s1190 + $0x8] sm:$0xf]
        %v1194 = vld [vmem:[%s1190 + $0xc] sm:$0xf]
        %v1195 = vld [vmem:[%s1190 + $0x10] sm:$0xf]
        %v1196 = vld [vmem:[%s1190 + $0x14] sm:$0xf]
        %v1197 = vld [vmem:[%s1190 + $0x18] sm:$0xf]
        %v1198 = vld [vmem:[%s1190 + $0x1c] sm:$0xf]
        %v1199 = vld [vmem:[%s1190 + $0x20] sm:$0xf]
        %v1200 = vld [vmem:[%s1190 + $0x24] sm:$0xf]
        %v1201 = vld [vmem:[%s1190 + $0x28] sm:$0xf]
        %v1202 = vld [vmem:[%s1190 + $0x2c] sm:$0xf]
        %v1203 = vld [vmem:[%s1190 + $0x30] sm:$0xf]
        %v1204 = vld [vmem:[%s1190 + $0x34] sm:$0xf]
        %v1205 = vld [vmem:[%s1190 + $0x38] sm:$0xf]
        %v1206 = vld [vmem:[%s1190 + $0x3c] sm:$0xf]
        %v1211 = vcombine.low %v1186, %v1187
        %v1212 = vcombine.low %v1188, %v1189
        %v1214 = vunpack.c.l.s4 1983009808
        %v1215 = vunpack.c.0.s8 %v1214
        %v1216 = vlaneseq
        %v1217 = vshrl.u32 %v1216, 7
        %v1218 = vsub.s32 %v1215, %v1217
        %v1219 = vrot.slane %v1211, %v1218
        %v1221 = vunpack.c.l.s4 1983009808
        %v1222 = vunpack.c.0.s8 %v1221
        %v1223 = vlaneseq
        %v1224 = vshrl.u32 %v1223, 7
        %v1225 = vsub.s32 %v1222, %v1224
        %v1226 = vrot.slane %v1212, %v1225
        %v1227 = vcombine.low %v1219, %v1226
        %v1245 = vunpack.c.l.b16 %v1191
        %v1246 = vunpack.c.l.b16 %v1192
        %v1247 = vunpack.c.l.b16 %v1193
        %v1248 = vunpack.c.l.b16 %v1194
        %v1249 = vunpack.c.l.b16 %v1195
        %v1250 = vunpack.c.l.b16 %v1196
        %v1251 = vunpack.c.l.b16 %v1197
        %v1252 = vunpack.c.l.b16 %v1198
        %v1253 = vunpack.c.l.b16 %v1199
        %v1254 = vunpack.c.l.b16 %v1200
        %v1255 = vunpack.c.l.b16 %v1201
        %v1256 = vunpack.c.l.b16 %v1202
        %v1257 = vunpack.c.l.b16 %v1203
        %v1258 = vunpack.c.l.b16 %v1204
        %v1259 = vunpack.c.l.b16 %v1205
        %v1260 = vunpack.c.l.b16 %v1206
        %v1261 = vpack.c.b16 %v1246, %v1245
        %v1262 = vpack.c.b16 %v1248, %v1247
        %v1263 = vpack.c.b16 %v1250, %v1249
        %v1264 = vpack.c.b16 %v1252, %v1251
        %v1265 = vpack.c.b16 %v1254, %v1253
        %v1266 = vpack.c.b16 %v1256, %v1255
        %v1267 = vpack.c.b16 %v1258, %v1257
        %v1268 = vpack.c.b16 %v1260, %v1259
        %1277 = vmatprep.subr.bf16.mxu0 0
        %1278 = vmatpush1.bf16.msra.mxu0 %v1261
        %1279 = vmatprep.subr.bf16.mxu0 0
        %1280 = vmatpush1.bf16.msra.mxu0 %v1262
        %1281 = vmatprep.subr.bf16.mxu0 0
        %1282 = vmatpush1.bf16.msra.mxu0 %v1263
        %1283 = vmatprep.subr.bf16.mxu0 0
        %1284 = vmatpush1.bf16.msra.mxu0 %v1264
        %1285 = vmatprep.subr.bf16.mxu0 0
        %1286 = vmatpush1.bf16.msra.mxu0 %v1265
        %1287 = vmatprep.subr.bf16.mxu0 0
        %1288 = vmatpush1.bf16.msra.mxu0 %v1266
        %1289 = vmatprep.subr.bf16.mxu0 0
        %1290 = vmatpush1.bf16.msra.mxu0 %v1267
        %1291 = vmatprep.subr.bf16.mxu0 0
        %1292 = vmatpush1.bf16.msra.mxu0 %v1268
        %1293 = vmatprep.subr.bf16.mxu0 0
        %1294 = vmatpush1.bf16.msra.mxu0 0
        %1295 = vmatprep.subr.bf16.mxu0 0
        %1296 = vmatpush1.bf16.msra.mxu0 0
        %1297 = vmatprep.subr.bf16.mxu0 0
        %1298 = vmatpush1.bf16.msra.mxu0 0
        %1299 = vmatprep.subr.bf16.mxu0 0
        %1300 = vmatpush1.bf16.msra.mxu0 0
        %1301 = vmatprep.subr.bf16.mxu0 0
        %1302 = vmatpush1.bf16.msra.mxu0 0
        %1303 = vmatprep.subr.bf16.mxu0 0
        %1304 = vmatpush1.bf16.msra.mxu0 0
        %1305 = vmatprep.subr.bf16.mxu0 0
        %1306 = vmatpush1.bf16.msra.mxu0 0
        %1307 = vmatprep.subr.bf16.mxu0 0
        %1308 = vmatpush1.bf16.msra.mxu0 0
        %1309 = vmatprep.mubr.bf16.mxu0 0
        %1310 = vmatmul.mubr.bf16.gmra.mrb[0].mxu0 %v1227
        %v1311 = vpop.f32.mrb[0].mxu0
        %v1312 = vadd.f32 0.0, %v1311
        %v1313 = vpop.f32.mrb[0].mxu0
        %v1314 = vpop.f32.mrb[0].mxu0
        %v1315 = vadd.f32 0.0, %v1314
        %v1316 = vpop.f32.mrb[0].mxu0
        %1317 = vdwg.mxu0
        %v1318 = vadd.f32 %v1184, %v1312
        %v1319 = vadd.f32 %v1185, %v1315
        %v1320 = vld [vmem:[%s516] sm:$0x7]
        %v1321 = vld [vmem:[%s516 + $0x4] sm:$0x7]
        %v1322 = vld [vmem:[%s516 + $0x8] sm:$0x7]
        %v1323 = vld [vmem:[%s516 + $0xc] sm:$0x7]
        %v1329 = vunpack.c.l.s4 1983009808
        %v1330 = vunpack.c.0.s8 %v1329
        %v1331 = vlaneseq
        %v1332 = vshrl.u32 %v1331, 7
        %v1333 = vsub.s32 %v1330, %v1332
        %v1334 = vrot.slane %v1320, %v1333
        %v1335 = vcombine.high %v1334, %v1334
        %v1337 = vunpack.c.l.s4 1983009808
        %v1338 = vunpack.c.0.s8 %v1337
        %v1339 = vlaneseq
        %v1340 = vshrl.u32 %v1339, 7
        %v1341 = vsub.s32 %v1338, %v1340
        %v1342 = vrot.slane %v1321, %v1341
        %v1343 = vcombine.high %v1342, %v1342
        %v1345 = vunpack.c.l.s4 1983009808
        %v1346 = vunpack.c.0.s8 %v1345
        %v1347 = vlaneseq
        %v1348 = vshrl.u32 %v1347, 7
        %v1349 = vsub.s32 %v1346, %v1348
        %v1350 = vrot.slane %v1322, %v1349
        %v1351 = vcombine.high %v1350, %v1350
        %v1353 = vunpack.c.l.s4 1983009808
        %v1354 = vunpack.c.0.s8 %v1353
        %v1355 = vlaneseq
        %v1356 = vshrl.u32 %v1355, 7
        %v1357 = vsub.s32 %v1354, %v1356
        %v1358 = vrot.slane %v1323, %v1357
        %v1359 = vcombine.high %v1358, %v1358
        %v1361 = vshrl.u32 %v1334, 16
        %v1363 = vrot.slane %v1361, 6
        %v1364 = vshll.u32 %v1334, 16
        %v1366 = vrot.slane %v1364, 7
        %v1367 = vor.u32 %v1363, %v1366
        %v1368 = vrot.slane %v1367, 2
        %v1370 = vshll.u32 %v1335, 16
        %v1372 = vrot.slane %v1370, 7
        %v1373 = vsel %vm707, %v1368, %v1372
        %v1375 = vshrl.u32 %v1342, 16
        %v1377 = vrot.slane %v1375, 6
        %v1378 = vshll.u32 %v1342, 16
        %v1380 = vrot.slane %v1378, 7
        %v1381 = vor.u32 %v1377, %v1380
        %v1382 = vrot.slane %v1381, 2
        %v1384 = vshll.u32 %v1343, 16
        %v1386 = vrot.slane %v1384, 7
        %v1387 = vsel %vm707, %v1382, %v1386
        %v1389 = vshrl.u32 %v1350, 16
        %v1391 = vrot.slane %v1389, 6
        %v1392 = vshll.u32 %v1350, 16
        %v1394 = vrot.slane %v1392, 7
        %v1395 = vor.u32 %v1391, %v1394
        %v1396 = vrot.slane %v1395, 2
        %v1398 = vshll.u32 %v1351, 16
        %v1400 = vrot.slane %v1398, 7
        %v1401 = vsel %vm707, %v1396, %v1400
        %v1403 = vshrl.u32 %v1358, 16
        %v1405 = vrot.slane %v1403, 6
        %v1406 = vshll.u32 %v1358, 16
        %v1408 = vrot.slane %v1406, 7
        %v1409 = vor.u32 %v1405, %v1408
        %v1410 = vrot.slane %v1409, 2
        %v1412 = vshll.u32 %v1359, 16
        %v1414 = vrot.slane %v1412, 7
        %v1415 = vsel %vm707, %v1410, %v1414
        %s1416 = scalar_lea.vmem [#allocation6], 256
        %v1417 = vld [vmem:[%s1416] sm:$0xf]
        %v1418 = vld [vmem:[%s1416 + $0x4] sm:$0xf]
        %v1419 = vld [vmem:[%s1416 + $0x8] sm:$0xf]
        %v1420 = vld [vmem:[%s1416 + $0xc] sm:$0xf]
        %v1421 = vld [vmem:[%s1416 + $0x10] sm:$0xf]
        %v1422 = vld [vmem:[%s1416 + $0x14] sm:$0xf]
        %v1423 = vld [vmem:[%s1416 + $0x18] sm:$0xf]
        %v1424 = vld [vmem:[%s1416 + $0x1c] sm:$0xf]
        %v1425 = vld [vmem:[%s1416 + $0x20] sm:$0xf]
        %v1426 = vld [vmem:[%s1416 + $0x24] sm:$0xf]
        %v1427 = vld [vmem:[%s1416 + $0x28] sm:$0xf]
        %v1428 = vld [vmem:[%s1416 + $0x2c] sm:$0xf]
        %v1429 = vld [vmem:[%s1416 + $0x30] sm:$0xf]
        %v1430 = vld [vmem:[%s1416 + $0x34] sm:$0xf]
        %v1431 = vld [vmem:[%s1416 + $0x38] sm:$0xf]
        %v1432 = vld [vmem:[%s1416 + $0x3c] sm:$0xf]
        %v1433 = vcombine.low %v1373, %v1387
        %v1434 = vcombine.low %v1401, %v1415
        %v1436 = vunpack.c.l.s4 1983009808
        %v1437 = vunpack.c.0.s8 %v1436
        %v1438 = vlaneseq
        %v1439 = vshrl.u32 %v1438, 7
        %v1440 = vsub.s32 %v1437, %v1439
        %v1441 = vrot.slane %v1433, %v1440
        %v1443 = vunpack.c.l.s4 1983009808
        %v1444 = vunpack.c.0.s8 %v1443
        %v1445 = vlaneseq
        %v1446 = vshrl.u32 %v1445, 7
        %v1447 = vsub.s32 %v1444, %v1446
        %v1448 = vrot.slane %v1434, %v1447
        %v1449 = vcombine.low %v1441, %v1448
        %v1467 = vunpack.c.l.b16 %v1417
        %v1468 = vunpack.c.l.b16 %v1418
        %v1469 = vunpack.c.l.b16 %v1419
        %v1470 = vunpack.c.l.b16 %v1420
        %v1471 = vunpack.c.l.b16 %v1421
        %v1472 = vunpack.c.l.b16 %v1422
        %v1473 = vunpack.c.l.b16 %v1423
        %v1474 = vunpack.c.l.b16 %v1424
        %v1475 = vunpack.c.l.b16 %v1425
        %v1476 = vunpack.c.l.b16 %v1426
        %v1477 = vunpack.c.l.b16 %v1427
        %v1478 = vunpack.c.l.b16 %v1428
        %v1479 = vunpack.c.l.b16 %v1429
        %v1480 = vunpack.c.l.b16 %v1430
        %v1481 = vunpack.c.l.b16 %v1431
        %v1482 = vunpack.c.l.b16 %v1432
        %v1483 = vpack.c.b16 %v1468, %v1467
        %v1484 = vpack.c.b16 %v1470, %v1469
        %v1485 = vpack.c.b16 %v1472, %v1471
        %v1486 = vpack.c.b16 %v1474, %v1473
        %v1487 = vpack.c.b16 %v1476, %v1475
        %v1488 = vpack.c.b16 %v1478, %v1477
        %v1489 = vpack.c.b16 %v1480, %v1479
        %v1490 = vpack.c.b16 %v1482, %v1481
        %1499 = vmatprep.subr.bf16.mxu0 0
        %1500 = vmatpush1.bf16.msra.mxu0 %v1483
        %1501 = vmatprep.subr.bf16.mxu0 0
        %1502 = vmatpush1.bf16.msra.mxu0 %v1484
        %1503 = vmatprep.subr.bf16.mxu0 0
        %1504 = vmatpush1.bf16.msra.mxu0 %v1485
        %1505 = vmatprep.subr.bf16.mxu0 0
        %1506 = vmatpush1.bf16.msra.mxu0 %v1486
        %1507 = vmatprep.subr.bf16.mxu0 0
        %1508 = vmatpush1.bf16.msra.mxu0 %v1487
        %1509 = vmatprep.subr.bf16.mxu0 0
        %1510 = vmatpush1.bf16.msra.mxu0 %v1488
        %1511 = vmatprep.subr.bf16.mxu0 0
        %1512 = vmatpush1.bf16.msra.mxu0 %v1489
        %1513 = vmatprep.subr.bf16.mxu0 0
        %1514 = vmatpush1.bf16.msra.mxu0 %v1490
        %1515 = vmatprep.subr.bf16.mxu0 0
        %1516 = vmatpush1.bf16.msra.mxu0 0
        %1517 = vmatprep.subr.bf16.mxu0 0
        %1518 = vmatpush1.bf16.msra.mxu0 0
        %1519 = vmatprep.subr.bf16.mxu0 0
        %1520 = vmatpush1.bf16.msra.mxu0 0
        %1521 = vmatprep.subr.bf16.mxu0 0
        %1522 = vmatpush1.bf16.msra.mxu0 0
        %1523 = vmatprep.subr.bf16.mxu0 0
        %1524 = vmatpush1.bf16.msra.mxu0 0
        %1525 = vmatprep.subr.bf16.mxu0 0
        %1526 = vmatpush1.bf16.msra.mxu0 0
        %1527 = vmatprep.subr.bf16.mxu0 0
        %1528 = vmatpush1.bf16.msra.mxu0 0
        %1529 = vmatprep.subr.bf16.mxu0 0
        %1530 = vmatpush1.bf16.msra.mxu0 0
        %1531 = vmatprep.mubr.bf16.mxu0 0
        %1532 = vmatmul.mubr.bf16.gmra.mrb[0].mxu0 %v1449
        %v1533 = vpop.f32.mrb[0].mxu0
        %v1534 = vadd.f32 0.0, %v1533
        %v1535 = vpop.f32.mrb[0].mxu0
        %v1536 = vpop.f32.mrb[0].mxu0
        %v1537 = vadd.f32 0.0, %v1536
        %v1538 = vpop.f32.mrb[0].mxu0
        %1539 = vdwg.mxu0
        %v1540 = vadd.f32 %v1318, %v1534
        %v1541 = vadd.f32 %v1319, %v1537
        %v1542 = vld [vmem:[%s516] sm:$0x6]
        %v1543 = vld [vmem:[%s516 + $0x4] sm:$0x6]
        %v1544 = vld [vmem:[%s516 + $0x8] sm:$0x6]
        %v1545 = vld [vmem:[%s516 + $0xc] sm:$0x6]
        %v1551 = vunpack.c.l.s4 1983009808
        %v1552 = vunpack.c.0.s8 %v1551
        %v1553 = vlaneseq
        %v1554 = vshrl.u32 %v1553, 7
        %v1555 = vsub.s32 %v1552, %v1554
        %v1556 = vrot.slane %v1542, %v1555
        %v1557 = vcombine.high %v1556, %v1556
        %v1559 = vunpack.c.l.s4 1983009808
        %v1560 = vunpack.c.0.s8 %v1559
        %v1561 = vlaneseq
        %v1562 = vshrl.u32 %v1561, 7
        %v1563 = vsub.s32 %v1560, %v1562
        %v1564 = vrot.slane %v1543, %v1563
        %v1565 = vcombine.high %v1564, %v1564
        %v1567 = vunpack.c.l.s4 1983009808
        %v1568 = vunpack.c.0.s8 %v1567
        %v1569 = vlaneseq
        %v1570 = vshrl.u32 %v1569, 7
        %v1571 = vsub.s32 %v1568, %v1570
        %v1572 = vrot.slane %v1544, %v1571
        %v1573 = vcombine.high %v1572, %v1572
        %v1575 = vunpack.c.l.s4 1983009808
        %v1576 = vunpack.c.0.s8 %v1575
        %v1577 = vlaneseq
        %v1578 = vshrl.u32 %v1577, 7
        %v1579 = vsub.s32 %v1576, %v1578
        %v1580 = vrot.slane %v1545, %v1579
        %v1581 = vcombine.high %v1580, %v1580
        %v1582 = vrot.slane %v1556, 7
        %v1583 = vrot.slane %v1582, 2
        %v1584 = vrot.slane %v1557, 7
        %v1585 = vsel %vm1043, %v1583, %v1584
        %v1586 = vrot.slane %v1564, 7
        %v1587 = vrot.slane %v1586, 2
        %v1588 = vrot.slane %v1565, 7
        %v1589 = vsel %vm1043, %v1587, %v1588
        %v1590 = vrot.slane %v1572, 7
        %v1591 = vrot.slane %v1590, 2
        %v1592 = vrot.slane %v1573, 7
        %v1593 = vsel %vm1043, %v1591, %v1592
        %v1594 = vrot.slane %v1580, 7
        %v1595 = vrot.slane %v1594, 2
        %v1596 = vrot.slane %v1581, 7
        %v1597 = vsel %vm1043, %v1595, %v1596
        %s1598 = scalar_lea.vmem [#allocation6], 320
        %v1599 = vld [vmem:[%s1598] sm:$0xf]
        %v1600 = vld [vmem:[%s1598 + $0x4] sm:$0xf]
        %v1601 = vld [vmem:[%s1598 + $0x8] sm:$0xf]
        %v1602 = vld [vmem:[%s1598 + $0xc] sm:$0xf]
        %v1603 = vld [vmem:[%s1598 + $0x10] sm:$0xf]
        %v1604 = vld [vmem:[%s1598 + $0x14] sm:$0xf]
        %v1605 = vld [vmem:[%s1598 + $0x18] sm:$0xf]
        %v1606 = vld [vmem:[%s1598 + $0x1c] sm:$0xf]
        %v1607 = vld [vmem:[%s1598 + $0x20] sm:$0xf]
        %v1608 = vld [vmem:[%s1598 + $0x24] sm:$0xf]
        %v1609 = vld [vmem:[%s1598 + $0x28] sm:$0xf]
        %v1610 = vld [vmem:[%s1598 + $0x2c] sm:$0xf]
        %v1611 = vld [vmem:[%s1598 + $0x30] sm:$0xf]
        %v1612 = vld [vmem:[%s1598 + $0x34] sm:$0xf]
        %v1613 = vld [vmem:[%s1598 + $0x38] sm:$0xf]
        %v1614 = vld [vmem:[%s1598 + $0x3c] sm:$0xf]
        %v1615 = vcombine.low %v1585, %v1589
        %v1616 = vcombine.low %v1593, %v1597
        %v1618 = vunpack.c.l.s4 1983009808
        %v1619 = vunpack.c.0.s8 %v1618
        %v1620 = vlaneseq
        %v1621 = vshrl.u32 %v1620, 7
        %v1622 = vsub.s32 %v1619, %v1621
        %v1623 = vrot.slane %v1615, %v1622
        %v1625 = vunpack.c.l.s4 1983009808
        %v1626 = vunpack.c.0.s8 %v1625
        %v1627 = vlaneseq
        %v1628 = vshrl.u32 %v1627, 7
        %v1629 = vsub.s32 %v1626, %v1628
        %v1630 = vrot.slane %v1616, %v1629
        %v1631 = vcombine.low %v1623, %v1630
        %v1649 = vunpack.c.l.b16 %v1599
        %v1650 = vunpack.c.l.b16 %v1600
        %v1651 = vunpack.c.l.b16 %v1601
        %v1652 = vunpack.c.l.b16 %v1602
        %v1653 = vunpack.c.l.b16 %v1603
        %v1654 = vunpack.c.l.b16 %v1604
        %v1655 = vunpack.c.l.b16 %v1605
        %v1656 = vunpack.c.l.b16 %v1606
        %v1657 = vunpack.c.l.b16 %v1607
        %v1658 = vunpack.c.l.b16 %v1608
        %v1659 = vunpack.c.l.b16 %v1609
        %v1660 = vunpack.c.l.b16 %v1610
        %v1661 = vunpack.c.l.b16 %v1611
        %v1662 = vunpack.c.l.b16 %v1612
        %v1663 = vunpack.c.l.b16 %v1613
        %v1664 = vunpack.c.l.b16 %v1614
        %v1665 = vpack.c.b16 %v1650, %v1649
        %v1666 = vpack.c.b16 %v1652, %v1651
        %v1667 = vpack.c.b16 %v1654, %v1653
        %v1668 = vpack.c.b16 %v1656, %v1655
        %v1669 = vpack.c.b16 %v1658, %v1657
        %v1670 = vpack.c.b16 %v1660, %v1659
        %v1671 = vpack.c.b16 %v1662, %v1661
        %v1672 = vpack.c.b16 %v1664, %v1663
        %1681 = vmatprep.subr.bf16.mxu0 0
        %1682 = vmatpush1.bf16.msra.mxu0 %v1665
        %1683 = vmatprep.subr.bf16.mxu0 0
        %1684 = vmatpush1.bf16.msra.mxu0 %v1666
        %1685 = vmatprep.subr.bf16.mxu0 0
        %1686 = vmatpush1.bf16.msra.mxu0 %v1667
        %1687 = vmatprep.subr.bf16.mxu0 0
        %1688 = vmatpush1.bf16.msra.mxu0 %v1668
        %1689 = vmatprep.subr.bf16.mxu0 0
        %1690 = vmatpush1.bf16.msra.mxu0 %v1669
        %1691 = vmatprep.subr.bf16.mxu0 0
        %1692 = vmatpush1.bf16.msra.mxu0 %v1670
        %1693 = vmatprep.subr.bf16.mxu0 0
        %1694 = vmatpush1.bf16.msra.mxu0 %v1671
        %1695 = vmatprep.subr.bf16.mxu0 0
        %1696 = vmatpush1.bf16.msra.mxu0 %v1672
        %1697 = vmatprep.subr.bf16.mxu0 0
        %1698 = vmatpush1.bf16.msra.mxu0 0
        %1699 = vmatprep.subr.bf16.mxu0 0
        %1700 = vmatpush1.bf16.msra.mxu0 0
        %1701 = vmatprep.subr.bf16.mxu0 0
        %1702 = vmatpush1.bf16.msra.mxu0 0
        %1703 = vmatprep.subr.bf16.mxu0 0
        %1704 = vmatpush1.bf16.msra.mxu0 0
        %1705 = vmatprep.subr.bf16.mxu0 0
        %1706 = vmatpush1.bf16.msra.mxu0 0
        %1707 = vmatprep.subr.bf16.mxu0 0
        %1708 = vmatpush1.bf16.msra.mxu0 0
        %1709 = vmatprep.subr.bf16.mxu0 0
        %1710 = vmatpush1.bf16.msra.mxu0 0
        %1711 = vmatprep.subr.bf16.mxu0 0
        %1712 = vmatpush1.bf16.msra.mxu0 0
        %1713 = vmatprep.mubr.bf16.mxu0 0
        %1714 = vmatmul.mubr.bf16.gmra.mrb[0].mxu0 %v1631
        %v1715 = vpop.f32.mrb[0].mxu0
        %v1716 = vadd.f32 0.0, %v1715
        %v1717 = vpop.f32.mrb[0].mxu0
        %v1718 = vpop.f32.mrb[0].mxu0
        %v1719 = vadd.f32 0.0, %v1718
        %v1720 = vpop.f32.mrb[0].mxu0
        %1721 = vdwg.mxu0
        %v1722 = vadd.f32 %v1540, %v1716
        %v1723 = vadd.f32 %v1541, %v1719
        %s1724 = scalar_lea.vmem [#allocation2], 8
        %v1725 = vld [vmem:[%s1724] sm:$0x3]
        %v1726 = vld [vmem:[%s1724 + $0x4] sm:$0x3]
        %v1727 = vld [vmem:[%s1724 + $0x8] sm:$0x3]
        %v1728 = vld [vmem:[%s1724 + $0xc] sm:$0x3]
        %s1729 = scalar_lea.vmem [#allocation6], 384
        %v1730 = vld [vmem:[%s1729] sm:$0xf]
        %v1731 = vld [vmem:[%s1729 + $0x4] sm:$0xf]
        %v1732 = vld [vmem:[%s1729 + $0x8] sm:$0xf]
        %v1733 = vld [vmem:[%s1729 + $0xc] sm:$0xf]
        %v1734 = vld [vmem:[%s1729 + $0x10] sm:$0xf]
        %v1735 = vld [vmem:[%s1729 + $0x14] sm:$0xf]
        %v1736 = vld [vmem:[%s1729 + $0x18] sm:$0xf]
        %v1737 = vld [vmem:[%s1729 + $0x1c] sm:$0xf]
        %v1738 = vld [vmem:[%s1729 + $0x20] sm:$0xf]
        %v1739 = vld [vmem:[%s1729 + $0x24] sm:$0xf]
        %v1740 = vld [vmem:[%s1729 + $0x28] sm:$0xf]
        %v1741 = vld [vmem:[%s1729 + $0x2c] sm:$0xf]
        %v1742 = vld [vmem:[%s1729 + $0x30] sm:$0xf]
        %v1743 = vld [vmem:[%s1729 + $0x34] sm:$0xf]
        %v1744 = vld [vmem:[%s1729 + $0x38] sm:$0xf]
        %v1745 = vld [vmem:[%s1729 + $0x3c] sm:$0xf]
        %v1750 = vcombine.low %v1725, %v1726
        %v1751 = vcombine.low %v1727, %v1728
        %v1753 = vunpack.c.l.s4 1983009808
        %v1754 = vunpack.c.0.s8 %v1753
        %v1755 = vlaneseq
        %v1756 = vshrl.u32 %v1755, 7
        %v1757 = vsub.s32 %v1754, %v1756
        %v1758 = vrot.slane %v1750, %v1757
        %v1760 = vunpack.c.l.s4 1983009808
        %v1761 = vunpack.c.0.s8 %v1760
        %v1762 = vlaneseq
        %v1763 = vshrl.u32 %v1762, 7
        %v1764 = vsub.s32 %v1761, %v1763
        %v1765 = vrot.slane %v1751, %v1764
        %v1766 = vcombine.low %v1758, %v1765
        %v1784 = vunpack.c.l.b16 %v1730
        %v1785 = vunpack.c.l.b16 %v1731
        %v1786 = vunpack.c.l.b16 %v1732
        %v1787 = vunpack.c.l.b16 %v1733
        %v1788 = vunpack.c.l.b16 %v1734
        %v1789 = vunpack.c.l.b16 %v1735
        %v1790 = vunpack.c.l.b16 %v1736
        %v1791 = vunpack.c.l.b16 %v1737
        %v1792 = vunpack.c.l.b16 %v1738
        %v1793 = vunpack.c.l.b16 %v1739
        %v1794 = vunpack.c.l.b16 %v1740
        %v1795 = vunpack.c.l.b16 %v1741
        %v1796 = vunpack.c.l.b16 %v1742
        %v1797 = vunpack.c.l.b16 %v1743
        %v1798 = vunpack.c.l.b16 %v1744
        %v1799 = vunpack.c.l.b16 %v1745
        %v1800 = vpack.c.b16 %v1785, %v1784
        %v1801 = vpack.c.b16 %v1787, %v1786
        %v1802 = vpack.c.b16 %v1789, %v1788
        %v1803 = vpack.c.b16 %v1791, %v1790
        %v1804 = vpack.c.b16 %v1793, %v1792
        %v1805 = vpack.c.b16 %v1795, %v1794
        %v1806 = vpack.c.b16 %v1797, %v1796
        %v1807 = vpack.c.b16 %v1799, %v1798
        %1816 = vmatprep.subr.bf16.mxu0 0
        %1817 = vmatpush1.bf16.msra.mxu0 %v1800
        %1818 = vmatprep.subr.bf16.mxu0 0
        %1819 = vmatpush1.bf16.msra.mxu0 %v1801
        %1820 = vmatprep.subr.bf16.mxu0 0
        %1821 = vmatpush1.bf16.msra.mxu0 %v1802
        %1822 = vmatprep.subr.bf16.mxu0 0
        %1823 = vmatpush1.bf16.msra.mxu0 %v1803
        %1824 = vmatprep.subr.bf16.mxu0 0
        %1825 = vmatpush1.bf16.msra.mxu0 %v1804
        %1826 = vmatprep.subr.bf16.mxu0 0
        %1827 = vmatpush1.bf16.msra.mxu0 %v1805
        %1828 = vmatprep.subr.bf16.mxu0 0
        %1829 = vmatpush1.bf16.msra.mxu0 %v1806
        %1830 = vmatprep.subr.bf16.mxu0 0
        %1831 = vmatpush1.bf16.msra.mxu0 %v1807
        %1832 = vmatprep.subr.bf16.mxu0 0
        %1833 = vmatpush1.bf16.msra.mxu0 0
        %1834 = vmatprep.subr.bf16.mxu0 0
        %1835 = vmatpush1.bf16.msra.mxu0 0
        %1836 = vmatprep.subr.bf16.mxu0 0
        %1837 = vmatpush1.bf16.msra.mxu0 0
        %1838 = vmatprep.subr.bf16.mxu0 0
        %1839 = vmatpush1.bf16.msra.mxu0 0
        %1840 = vmatprep.subr.bf16.mxu0 0
        %1841 = vmatpush1.bf16.msra.mxu0 0
        %1842 = vmatprep.subr.bf16.mxu0 0
        %1843 = vmatpush1.bf16.msra.mxu0 0
        %1844 = vmatprep.subr.bf16.mxu0 0
        %1845 = vmatpush1.bf16.msra.mxu0 0
        %1846 = vmatprep.subr.bf16.mxu0 0
        %1847 = vmatpush1.bf16.msra.mxu0 0
        %1848 = vmatprep.mubr.bf16.mxu0 0
        %1849 = vmatmul.mubr.bf16.gmra.mrb[0].mxu0 %v1766
        %v1850 = vpop.f32.mrb[0].mxu0
        %v1851 = vadd.f32 0.0, %v1850
        %v1852 = vpop.f32.mrb[0].mxu0
        %v1853 = vpop.f32.mrb[0].mxu0
        %v1854 = vadd.f32 0.0, %v1853
        %v1855 = vpop.f32.mrb[0].mxu0
        %1856 = vdwg.mxu0
        %v1857 = vadd.f32 %v1722, %v1851
        %v1858 = vadd.f32 %v1723, %v1854
        %v1859 = vld [vmem:[%s1724] sm:$0x7]
        %v1860 = vld [vmem:[%s1724 + $0x4] sm:$0x7]
        %v1861 = vld [vmem:[%s1724 + $0x8] sm:$0x7]
        %v1862 = vld [vmem:[%s1724 + $0xc] sm:$0x7]
        %v1868 = vunpack.c.l.s4 1983009808
        %v1869 = vunpack.c.0.s8 %v1868
        %v1870 = vlaneseq
        %v1871 = vshrl.u32 %v1870, 7
        %v1872 = vsub.s32 %v1869, %v1871
        %v1873 = vrot.slane %v1859, %v1872
        %v1874 = vcombine.high %v1873, %v1873
        %v1876 = vunpack.c.l.s4 1983009808
        %v1877 = vunpack.c.0.s8 %v1876
        %v1878 = vlaneseq
        %v1879 = vshrl.u32 %v1878, 7
        %v1880 = vsub.s32 %v1877, %v1879
        %v1881 = vrot.slane %v1860, %v1880
        %v1882 = vcombine.high %v1881, %v1881
        %v1884 = vunpack.c.l.s4 1983009808
        %v1885 = vunpack.c.0.s8 %v1884
        %v1886 = vlaneseq
        %v1887 = vshrl.u32 %v1886, 7
        %v1888 = vsub.s32 %v1885, %v1887
        %v1889 = vrot.slane %v1861, %v1888
        %v1890 = vcombine.high %v1889, %v1889
        %v1892 = vunpack.c.l.s4 1983009808
        %v1893 = vunpack.c.0.s8 %v1892
        %v1894 = vlaneseq
        %v1895 = vshrl.u32 %v1894, 7
        %v1896 = vsub.s32 %v1893, %v1895
        %v1897 = vrot.slane %v1862, %v1896
        %v1898 = vcombine.high %v1897, %v1897
        %v1900 = vshrl.u32 %v1873, 16
        %v1902 = vrot.slane %v1900, 6
        %v1903 = vshll.u32 %v1873, 16
        %v1905 = vrot.slane %v1903, 7
        %v1906 = vor.u32 %v1902, %v1905
        %v1907 = vrot.slane %v1906, 2
        %v1909 = vshll.u32 %v1874, 16
        %v1911 = vrot.slane %v1909, 7
        %v1912 = vsel %vm707, %v1907, %v1911
        %v1914 = vshrl.u32 %v1881, 16
        %v1916 = vrot.slane %v1914, 6
        %v1917 = vshll.u32 %v1881, 16
        %v1919 = vrot.slane %v1917, 7
        %v1920 = vor.u32 %v1916, %v1919
        %v1921 = vrot.slane %v1920, 2
        %v1923 = vshll.u32 %v1882, 16
        %v1925 = vrot.slane %v1923, 7
        %v1926 = vsel %vm707, %v1921, %v1925
        %v1928 = vshrl.u32 %v1889, 16
        %v1930 = vrot.slane %v1928, 6
        %v1931 = vshll.u32 %v1889, 16
        %v1933 = vrot.slane %v1931, 7
        %v1934 = vor.u32 %v1930, %v1933
        %v1935 = vrot.slane %v1934, 2
        %v1937 = vshll.u32 %v1890, 16
        %v1939 = vrot.slane %v1937, 7
        %v1940 = vsel %vm707, %v1935, %v1939
        %v1942 = vshrl.u32 %v1897, 16
        %v1944 = vrot.slane %v1942, 6
        %v1945 = vshll.u32 %v1897, 16
        %v1947 = vrot.slane %v1945, 7
        %v1948 = vor.u32 %v1944, %v1947
        %v1949 = vrot.slane %v1948, 2
        %v1951 = vshll.u32 %v1898, 16
        %v1953 = vrot.slane %v1951, 7
        %v1954 = vsel %vm707, %v1949, %v1953
        %s1955 = scalar_lea.vmem [#allocation6], 448
        %v1956 = vld [vmem:[%s1955] sm:$0xf]
        %v1957 = vld [vmem:[%s1955 + $0x4] sm:$0xf]
        %v1958 = vld [vmem:[%s1955 + $0x8] sm:$0xf]
        %v1959 = vld [vmem:[%s1955 + $0xc] sm:$0xf]
        %v1960 = vld [vmem:[%s1955 + $0x10] sm:$0xf]
        %v1961 = vld [vmem:[%s1955 + $0x14] sm:$0xf]
        %v1962 = vld [vmem:[%s1955 + $0x18] sm:$0xf]
        %v1963 = vld [vmem:[%s1955 + $0x1c] sm:$0xf]
        %v1964 = vld [vmem:[%s1955 + $0x20] sm:$0xf]
        %v1965 = vld [vmem:[%s1955 + $0x24] sm:$0xf]
        %v1966 = vld [vmem:[%s1955 + $0x28] sm:$0xf]
        %v1967 = vld [vmem:[%s1955 + $0x2c] sm:$0xf]
        %v1968 = vld [vmem:[%s1955 + $0x30] sm:$0xf]
        %v1969 = vld [vmem:[%s1955 + $0x34] sm:$0xf]
        %v1970 = vld [vmem:[%s1955 + $0x38] sm:$0xf]
        %v1971 = vld [vmem:[%s1955 + $0x3c] sm:$0xf]
        %v1972 = vcombine.low %v1912, %v1926
        %v1973 = vcombine.low %v1940, %v1954
        %v1975 = vunpack.c.l.s4 1983009808
        %v1976 = vunpack.c.0.s8 %v1975
        %v1977 = vlaneseq
        %v1978 = vshrl.u32 %v1977, 7
        %v1979 = vsub.s32 %v1976, %v1978
        %v1980 = vrot.slane %v1972, %v1979
        %v1982 = vunpack.c.l.s4 1983009808
        %v1983 = vunpack.c.0.s8 %v1982
        %v1984 = vlaneseq
        %v1985 = vshrl.u32 %v1984, 7
        %v1986 = vsub.s32 %v1983, %v1985
        %v1987 = vrot.slane %v1973, %v1986
        %v1988 = vcombine.low %v1980, %v1987
        %v2006 = vunpack.c.l.b16 %v1956
        %v2007 = vunpack.c.l.b16 %v1957
        %v2008 = vunpack.c.l.b16 %v1958
        %v2009 = vunpack.c.l.b16 %v1959
        %v2010 = vunpack.c.l.b16 %v1960
        %v2011 = vunpack.c.l.b16 %v1961
        %v2012 = vunpack.c.l.b16 %v1962
        %v2013 = vunpack.c.l.b16 %v1963
        %v2014 = vunpack.c.l.b16 %v1964
        %v2015 = vunpack.c.l.b16 %v1965
        %v2016 = vunpack.c.l.b16 %v1966
        %v2017 = vunpack.c.l.b16 %v1967
        %v2018 = vunpack.c.l.b16 %v1968
        %v2019 = vunpack.c.l.b16 %v1969
        %v2020 = vunpack.c.l.b16 %v1970
        %v2021 = vunpack.c.l.b16 %v1971
        %v2022 = vpack.c.b16 %v2007, %v2006
        %v2023 = vpack.c.b16 %v2009, %v2008
        %v2024 = vpack.c.b16 %v2011, %v2010
        %v2025 = vpack.c.b16 %v2013, %v2012
        %v2026 = vpack.c.b16 %v2015, %v2014
        %v2027 = vpack.c.b16 %v2017, %v2016
        %v2028 = vpack.c.b16 %v2019, %v2018
        %v2029 = vpack.c.b16 %v2021, %v2020
        %2038 = vmatprep.subr.bf16.mxu0 0
        %2039 = vmatpush1.bf16.msra.mxu0 %v2022
        %2040 = vmatprep.subr.bf16.mxu0 0
        %2041 = vmatpush1.bf16.msra.mxu0 %v2023
        %2042 = vmatprep.subr.bf16.mxu0 0
        %2043 = vmatpush1.bf16.msra.mxu0 %v2024
        %2044 = vmatprep.subr.bf16.mxu0 0
        %2045 = vmatpush1.bf16.msra.mxu0 %v2025
        %2046 = vmatprep.subr.bf16.mxu0 0
        %2047 = vmatpush1.bf16.msra.mxu0 %v2026
        %2048 = vmatprep.subr.bf16.mxu0 0
        %2049 = vmatpush1.bf16.msra.mxu0 %v2027
        %2050 = vmatprep.subr.bf16.mxu0 0
        %2051 = vmatpush1.bf16.msra.mxu0 %v2028
        %2052 = vmatprep.subr.bf16.mxu0 0
        %2053 = vmatpush1.bf16.msra.mxu0 %v2029
        %2054 = vmatprep.subr.bf16.mxu0 0
        %2055 = vmatpush1.bf16.msra.mxu0 0
        %2056 = vmatprep.subr.bf16.mxu0 0
        %2057 = vmatpush1.bf16.msra.mxu0 0
        %2058 = vmatprep.subr.bf16.mxu0 0
        %2059 = vmatpush1.bf16.msra.mxu0 0
        %2060 = vmatprep.subr.bf16.mxu0 0
        %2061 = vmatpush1.bf16.msra.mxu0 0
        %2062 = vmatprep.subr.bf16.mxu0 0
        %2063 = vmatpush1.bf16.msra.mxu0 0
        %2064 = vmatprep.subr.bf16.mxu0 0
        %2065 = vmatpush1.bf16.msra.mxu0 0
        %2066 = vmatprep.subr.bf16.mxu0 0
        %2067 = vmatpush1.bf16.msra.mxu0 0
        %2068 = vmatprep.subr.bf16.mxu0 0
        %2069 = vmatpush1.bf16.msra.mxu0 0
        %2070 = vmatprep.mubr.bf16.mxu0 0
        %2071 = vmatmul.mubr.bf16.gmra.mrb[0].mxu0 %v1988
        %v2072 = vpop.f32.mrb[0].mxu0
        %v2073 = vadd.f32 0.0, %v2072
        %v2074 = vpop.f32.mrb[0].mxu0
        %v2075 = vpop.f32.mrb[0].mxu0
        %v2076 = vadd.f32 0.0, %v2075
        %v2077 = vpop.f32.mrb[0].mxu0
        %2078 = vdwg.mxu0
        %v2079 = vadd.f32 %v1857, %v2073
        %v2080 = vadd.f32 %v1858, %v2076
        %v2081 = vld [vmem:[%s1724] sm:$0x6]
        %v2082 = vld [vmem:[%s1724 + $0x4] sm:$0x6]
        %v2083 = vld [vmem:[%s1724 + $0x8] sm:$0x6]
        %v2084 = vld [vmem:[%s1724 + $0xc] sm:$0x6]
        %v2090 = vunpack.c.l.s4 1983009808
        %v2091 = vunpack.c.0.s8 %v2090
        %v2092 = vlaneseq
        %v2093 = vshrl.u32 %v2092, 7
        %v2094 = vsub.s32 %v2091, %v2093
        %v2095 = vrot.slane %v2081, %v2094
        %v2096 = vcombine.high %v2095, %v2095
        %v2098 = vunpack.c.l.s4 1983009808
        %v2099 = vunpack.c.0.s8 %v2098
        %v2100 = vlaneseq
        %v2101 = vshrl.u32 %v2100, 7
        %v2102 = vsub.s32 %v2099, %v2101
        %v2103 = vrot.slane %v2082, %v2102
        %v2104 = vcombine.high %v2103, %v2103
        %v2106 = vunpack.c.l.s4 1983009808
        %v2107 = vunpack.c.0.s8 %v2106
        %v2108 = vlaneseq
        %v2109 = vshrl.u32 %v2108, 7
        %v2110 = vsub.s32 %v2107, %v2109
        %v2111 = vrot.slane %v2083, %v2110
        %v2112 = vcombine.high %v2111, %v2111
        %v2114 = vunpack.c.l.s4 1983009808
        %v2115 = vunpack.c.0.s8 %v2114
        %v2116 = vlaneseq
        %v2117 = vshrl.u32 %v2116, 7
        %v2118 = vsub.s32 %v2115, %v2117
        %v2119 = vrot.slane %v2084, %v2118
        %v2120 = vcombine.high %v2119, %v2119
        %v2121 = vrot.slane %v2095, 7
        %v2122 = vrot.slane %v2121, 2
        %v2123 = vrot.slane %v2096, 7
        %v2124 = vsel %vm1043, %v2122, %v2123
        %v2125 = vrot.slane %v2103, 7
        %v2126 = vrot.slane %v2125, 2
        %v2127 = vrot.slane %v2104, 7
        %v2128 = vsel %vm1043, %v2126, %v2127
        %v2129 = vrot.slane %v2111, 7
        %v2130 = vrot.slane %v2129, 2
        %v2131 = vrot.slane %v2112, 7
        %v2132 = vsel %vm1043, %v2130, %v2131
        %v2133 = vrot.slane %v2119, 7
        %v2134 = vrot.slane %v2133, 2
        %v2135 = vrot.slane %v2120, 7
        %v2136 = vsel %vm1043, %v2134, %v2135
        %s2137 = scalar_lea.vmem [#allocation6], 512
        %v2138 = vld [vmem:[%s2137] sm:$0xf]
        %v2139 = vld [vmem:[%s2137 + $0x4] sm:$0xf]
        %v2140 = vld [vmem:[%s2137 + $0x8] sm:$0xf]
        %v2141 = vld [vmem:[%s2137 + $0xc] sm:$0xf]
        %v2142 = vld [vmem:[%s2137 + $0x10] sm:$0xf]
        %v2143 = vld [vmem:[%s2137 + $0x14] sm:$0xf]
        %v2144 = vld [vmem:[%s2137 + $0x18] sm:$0xf]
        %v2145 = vld [vmem:[%s2137 + $0x1c] sm:$0xf]
        %v2146 = vld [vmem:[%s2137 + $0x20] sm:$0xf]
        %v2147 = vld [vmem:[%s2137 + $0x24] sm:$0xf]
        %v2148 = vld [vmem:[%s2137 + $0x28] sm:$0xf]
        %v2149 = vld [vmem:[%s2137 + $0x2c] sm:$0xf]
        %v2150 = vld [vmem:[%s2137 + $0x30] sm:$0xf]
        %v2151 = vld [vmem:[%s2137 + $0x34] sm:$0xf]
        %v2152 = vld [vmem:[%s2137 + $0x38] sm:$0xf]
        %v2153 = vld [vmem:[%s2137 + $0x3c] sm:$0xf]
        %v2154 = vcombine.low %v2124, %v2128
        %v2155 = vcombine.low %v2132, %v2136
        %v2157 = vunpack.c.l.s4 1983009808
        %v2158 = vunpack.c.0.s8 %v2157
        %v2159 = vlaneseq
        %v2160 = vshrl.u32 %v2159, 7
        %v2161 = vsub.s32 %v2158, %v2160
        %v2162 = vrot.slane %v2154, %v2161
        %v2164 = vunpack.c.l.s4 1983009808
        %v2165 = vunpack.c.0.s8 %v2164
        %v2166 = vlaneseq
        %v2167 = vshrl.u32 %v2166, 7
        %v2168 = vsub.s32 %v2165, %v2167
        %v2169 = vrot.slane %v2155, %v2168
        %v2170 = vcombine.low %v2162, %v2169
        %v2188 = vunpack.c.l.b16 %v2138
        %v2189 = vunpack.c.l.b16 %v2139
        %v2190 = vunpack.c.l.b16 %v2140
        %v2191 = vunpack.c.l.b16 %v2141
        %v2192 = vunpack.c.l.b16 %v2142
        %v2193 = vunpack.c.l.b16 %v2143
        %v2194 = vunpack.c.l.b16 %v2144
        %v2195 = vunpack.c.l.b16 %v2145
        %v2196 = vunpack.c.l.b16 %v2146
        %v2197 = vunpack.c.l.b16 %v2147
        %v2198 = vunpack.c.l.b16 %v2148
        %v2199 = vunpack.c.l.b16 %v2149
        %v2200 = vunpack.c.l.b16 %v2150
        %v2201 = vunpack.c.l.b16 %v2151
        %v2202 = vunpack.c.l.b16 %v2152
        %v2203 = vunpack.c.l.b16 %v2153
        %v2204 = vpack.c.b16 %v2189, %v2188
        %v2205 = vpack.c.b16 %v2191, %v2190
        %v2206 = vpack.c.b16 %v2193, %v2192
        %v2207 = vpack.c.b16 %v2195, %v2194
        %v2208 = vpack.c.b16 %v2197, %v2196
        %v2209 = vpack.c.b16 %v2199, %v2198
        %v2210 = vpack.c.b16 %v2201, %v2200
        %v2211 = vpack.c.b16 %v2203, %v2202
        %2220 = vmatprep.subr.bf16.mxu0 0
        %2221 = vmatpush1.bf16.msra.mxu0 %v2204
        %2222 = vmatprep.subr.bf16.mxu0 0
        %2223 = vmatpush1.bf16.msra.mxu0 %v2205
        %2224 = vmatprep.subr.bf16.mxu0 0
        %2225 = vmatpush1.bf16.msra.mxu0 %v2206
        %2226 = vmatprep.subr.bf16.mxu0 0
        %2227 = vmatpush1.bf16.msra.mxu0 %v2207
        %2228 = vmatprep.subr.bf16.mxu0 0
        %2229 = vmatpush1.bf16.msra.mxu0 %v2208
        %2230 = vmatprep.subr.bf16.mxu0 0
        %2231 = vmatpush1.bf16.msra.mxu0 %v2209
        %2232 = vmatprep.subr.bf16.mxu0 0
        %2233 = vmatpush1.bf16.msra.mxu0 %v2210
        %2234 = vmatprep.subr.bf16.mxu0 0
        %2235 = vmatpush1.bf16.msra.mxu0 %v2211
        %2236 = vmatprep.subr.bf16.mxu0 0
        %2237 = vmatpush1.bf16.msra.mxu0 0
        %2238 = vmatprep.subr.bf16.mxu0 0
        %2239 = vmatpush1.bf16.msra.mxu0 0
        %2240 = vmatprep.subr.bf16.mxu0 0
        %2241 = vmatpush1.bf16.msra.mxu0 0
        %2242 = vmatprep.subr.bf16.mxu0 0
        %2243 = vmatpush1.bf16.msra.mxu0 0
        %2244 = vmatprep.subr.bf16.mxu0 0
        %2245 = vmatpush1.bf16.msra.mxu0 0
        %2246 = vmatprep.subr.bf16.mxu0 0
        %2247 = vmatpush1.bf16.msra.mxu0 0
        %2248 = vmatprep.subr.bf16.mxu0 0
        %2249 = vmatpush1.bf16.msra.mxu0 0
        %2250 = vmatprep.subr.bf16.mxu0 0
        %2251 = vmatpush1.bf16.msra.mxu0 0
        %2252 = vmatprep.mubr.bf16.mxu0 0
        %2253 = vmatmul.mubr.bf16.gmra.mrb[0].mxu0 %v2170
        %v2254 = vpop.f32.mrb[0].mxu0
        %v2255 = vadd.f32 0.0, %v2254
        %v2256 = vpop.f32.mrb[0].mxu0
        %v2257 = vpop.f32.mrb[0].mxu0
        %v2258 = vadd.f32 0.0, %v2257
        %v2259 = vpop.f32.mrb[0].mxu0
        %2260 = vdwg.mxu0
        %v2261 = vadd.f32 %v2079, %v2255
        %v2262 = vadd.f32 %v2080, %v2258
        %v2263 = vld [vmem:[%s4] sm:$0x1]
        %v2265 = vlaneseq
        %v2266 = vshrl.u32 %v2265, 7
        %v2267 = vsub.s32 0, %v2266
        %v2268 = vrot.slane %v2263, %v2267
        %v2270 = vadd.f32 %v2261, %v2268
        %v2271 = vadd.f32 %v2262, %v2268
        %v2272 = vmax.f32 %v2270, 0.0
        %v2273 = vmax.f32 %v2271, 0.0
        %v2274 = vadd.f32 %v2272, %v2273
        %v2275 = vrot.slane %v2274, 4
        %v2276 = vadd.f32 %v2274, %v2275
        %v2277 = vrot.slane %v2276, 2
        %v2278 = vadd.f32 %v2276, %v2277
        %v2279 = vrot.slane %v2278, 1
        %v2280 = vadd.f32 %v2278, %v2279
        %v2281 = vrcp.pop 16.0
        %v2282 = vmul.f32 %v2280, %v2281
        %v2283 = vpack.c.bf16 %v2282, %v2282
        %v2284 = vld [vmem:[%s5] sm:$0xf]
        %v2285 = vld [vmem:[%s5 + $0x4] sm:$0xf]
        %v2286 = vld [vmem:[%s5 + $0x8] sm:$0xf]
        %v2287 = vld [vmem:[%s5 + $0xc] sm:$0xf]
        %v2288 = vld [vmem:[%s5 + $0x10] sm:$0xf]
        %v2289 = vld [vmem:[%s5 + $0x14] sm:$0xf]
        %v2290 = vld [vmem:[%s5 + $0x18] sm:$0xf]
        %v2291 = vld [vmem:[%s5 + $0x1c] sm:$0xf]
        %v2292 = vld [vmem:[%s5 + $0x20] sm:$0xf]
        %v2293 = vld [vmem:[%s5 + $0x24] sm:$0xf]
        %v2294 = vld [vmem:[%s5 + $0x28] sm:$0xf]
        %v2295 = vld [vmem:[%s5 + $0x2c] sm:$0xf]
        %v2296 = vld [vmem:[%s5 + $0x30] sm:$0xf]
        %v2297 = vld [vmem:[%s5 + $0x34] sm:$0xf]
        %v2298 = vld [vmem:[%s5 + $0x38] sm:$0xf]
        %v2299 = vld [vmem:[%s5 + $0x3c] sm:$0xf]
        %v2300 = vld [vmem:[%s6] sm:$0x1]
        %v2317 = vunpack.c.l.b16 %v2284
        %v2318 = vunpack.c.l.b16 %v2285
        %v2319 = vunpack.c.l.b16 %v2286
        %v2320 = vunpack.c.l.b16 %v2287
        %v2321 = vunpack.c.l.b16 %v2288
        %v2322 = vunpack.c.l.b16 %v2289
        %v2323 = vunpack.c.l.b16 %v2290
        %v2324 = vunpack.c.l.b16 %v2291
        %v2325 = vunpack.c.l.b16 %v2292
        %v2326 = vunpack.c.l.b16 %v2293
        %v2327 = vunpack.c.l.b16 %v2294
        %v2328 = vunpack.c.l.b16 %v2295
        %v2329 = vunpack.c.l.b16 %v2296
        %v2330 = vunpack.c.l.b16 %v2297
        %v2331 = vunpack.c.l.b16 %v2298
        %v2332 = vunpack.c.l.b16 %v2299
        %v2333 = vpack.c.b16 %v2318, %v2317
        %v2334 = vpack.c.b16 %v2320, %v2319
        %v2335 = vpack.c.b16 %v2322, %v2321
        %v2336 = vpack.c.b16 %v2324, %v2323
        %v2337 = vpack.c.b16 %v2326, %v2325
        %v2338 = vpack.c.b16 %v2328, %v2327
        %v2339 = vpack.c.b16 %v2330, %v2329
        %v2340 = vpack.c.b16 %v2332, %v2331
        %2349 = vmatprep.subr.bf16.mxu0 0
        %2350 = vmatpush1.bf16.msra.mxu0 %v2333
        %2351 = vmatprep.subr.bf16.mxu0 0
        %2352 = vmatpush1.bf16.msra.mxu0 %v2334
        %2353 = vmatprep.subr.bf16.mxu0 0
        %2354 = vmatpush1.bf16.msra.mxu0 %v2335
        %2355 = vmatprep.subr.bf16.mxu0 0
        %2356 = vmatpush1.bf16.msra.mxu0 %v2336
        %2357 = vmatprep.subr.bf16.mxu0 0
        %2358 = vmatpush1.bf16.msra.mxu0 %v2337
        %2359 = vmatprep.subr.bf16.mxu0 0
        %2360 = vmatpush1.bf16.msra.mxu0 %v2338
        %2361 = vmatprep.subr.bf16.mxu0 0
        %2362 = vmatpush1.bf16.msra.mxu0 %v2339
        %2363 = vmatprep.subr.bf16.mxu0 0
        %2364 = vmatpush1.bf16.msra.mxu0 %v2340
        %2365 = vmatprep.subr.bf16.mxu0 0
        %2366 = vmatpush1.bf16.msra.mxu0 0
        %2367 = vmatprep.subr.bf16.mxu0 0
        %2368 = vmatpush1.bf16.msra.mxu0 0
        %2369 = vmatprep.subr.bf16.mxu0 0
        %2370 = vmatpush1.bf16.msra.mxu0 0
        %2371 = vmatprep.subr.bf16.mxu0 0
        %2372 = vmatpush1.bf16.msra.mxu0 0
        %2373 = vmatprep.subr.bf16.mxu0 0
        %2374 = vmatpush1.bf16.msra.mxu0 0
        %2375 = vmatprep.subr.bf16.mxu0 0
        %2376 = vmatpush1.bf16.msra.mxu0 0
        %2377 = vmatprep.subr.bf16.mxu0 0
        %2378 = vmatpush1.bf16.msra.mxu0 0
        %2379 = vmatprep.subr.bf16.mxu0 0
        %2380 = vmatpush1.bf16.msra.mxu0 0
        %2381 = vmatprep.mubr.bf16.mxu0 0
        %2382 = vmatmul.mubr.bf16.gmra.mrb[0].mxu0 %v2283
        %v2383 = vpop.f32.mrb[0].mxu0
        %v2384 = vadd.f32 %v2300, %v2383
        %v2385 = vpop.f32.mrb[0].mxu0
        %v2386 = vpop.f32.mrb[0].mxu0
        %v2387 = vpop.f32.mrb[0].mxu0
        %2388 = vdwg.mxu0
        %v2389 = vmax.f32 %v2384, 0.0
        %v2390 = vpack.c.bf16 %v2389, %v2389
        %v2391 = vld [vmem:[#allocation8] sm:$0xf]
        %v2392 = vld [vmem:[#allocation8 + $0x4] sm:$0xf]
        %v2393 = vld [vmem:[#allocation8 + $0x8] sm:$0xf]
        %v2394 = vld [vmem:[#allocation8 + $0xc] sm:$0xf]
        %v2395 = vld [vmem:[#allocation8 + $0x10] sm:$0xf]
        %v2396 = vld [vmem:[#allocation8 + $0x14] sm:$0xf]
        %v2397 = vld [vmem:[#allocation8 + $0x18] sm:$0xf]
        %v2398 = vld [vmem:[#allocation8 + $0x1c] sm:$0xf]
        %v2399 = vld [vmem:[#allocation8 + $0x20] sm:$0xf]
        %v2400 = vld [vmem:[#allocation8 + $0x24] sm:$0xf]
        %v2401 = vld [vmem:[#allocation8 + $0x28] sm:$0xf]
        %v2402 = vld [vmem:[#allocation8 + $0x2c] sm:$0xf]
        %v2403 = vld [vmem:[#allocation8 + $0x30] sm:$0xf]
        %v2404 = vld [vmem:[#allocation8 + $0x34] sm:$0xf]
        %v2405 = vld [vmem:[#allocation8 + $0x38] sm:$0xf]
        %v2406 = vld [vmem:[#allocation8 + $0x3c] sm:$0xf]
        %v2407 = vld [vmem:[%s8] sm:$0x1]
        %v2424 = vunpack.c.l.b16 %v2391
        %v2425 = vunpack.c.l.b16 %v2392
        %v2426 = vunpack.c.l.b16 %v2393
        %v2427 = vunpack.c.l.b16 %v2394
        %v2428 = vunpack.c.l.b16 %v2395
        %v2429 = vunpack.c.l.b16 %v2396
        %v2430 = vunpack.c.l.b16 %v2397
        %v2431 = vunpack.c.l.b16 %v2398
        %v2432 = vunpack.c.l.b16 %v2399
        %v2433 = vunpack.c.l.b16 %v2400
        %v2434 = vunpack.c.l.b16 %v2401
        %v2435 = vunpack.c.l.b16 %v2402
        %v2436 = vunpack.c.l.b16 %v2403
        %v2437 = vunpack.c.l.b16 %v2404
        %v2438 = vunpack.c.l.b16 %v2405
        %v2439 = vunpack.c.l.b16 %v2406
        %v2440 = vpack.c.b16 %v2425, %v2424
        %v2441 = vpack.c.b16 %v2427, %v2426
        %v2442 = vpack.c.b16 %v2429, %v2428
        %v2443 = vpack.c.b16 %v2431, %v2430
        %v2444 = vpack.c.b16 %v2433, %v2432
        %v2445 = vpack.c.b16 %v2435, %v2434
        %v2446 = vpack.c.b16 %v2437, %v2436
        %v2447 = vpack.c.b16 %v2439, %v2438
        %2456 = vmatprep.subr.bf16.mxu0 0
        %2457 = vmatpush1.bf16.msra.mxu0 %v2440
        %2458 = vmatprep.subr.bf16.mxu0 0
        %2459 = vmatpush1.bf16.msra.mxu0 %v2441
        %2460 = vmatprep.subr.bf16.mxu0 0
        %2461 = vmatpush1.bf16.msra.mxu0 %v2442
        %2462 = vmatprep.subr.bf16.mxu0 0
        %2463 = vmatpush1.bf16.msra.mxu0 %v2443
        %2464 = vmatprep.subr.bf16.mxu0 0
        %2465 = vmatpush1.bf16.msra.mxu0 %v2444
        %2466 = vmatprep.subr.bf16.mxu0 0
        %2467 = vmatpush1.bf16.msra.mxu0 %v2445
        %2468 = vmatprep.subr.bf16.mxu0 0
        %2469 = vmatpush1.bf16.msra.mxu0 %v2446
        %2470 = vmatprep.subr.bf16.mxu0 0
        %2471 = vmatpush1.bf16.msra.mxu0 %v2447
        %2472 = vmatprep.subr.bf16.mxu0 0
        %2473 = vmatpush1.bf16.msra.mxu0 0
        %2474 = vmatprep.subr.bf16.mxu0 0
        %2475 = vmatpush1.bf16.msra.mxu0 0
        %2476 = vmatprep.subr.bf16.mxu0 0
        %2477 = vmatpush1.bf16.msra.mxu0 0
        %2478 = vmatprep.subr.bf16.mxu0 0
        %2479 = vmatpush1.bf16.msra.mxu0 0
        %2480 = vmatprep.subr.bf16.mxu0 0
        %2481 = vmatpush1.bf16.msra.mxu0 0
        %2482 = vmatprep.subr.bf16.mxu0 0
        %2483 = vmatpush1.bf16.msra.mxu0 0
        %2484 = vmatprep.subr.bf16.mxu0 0
        %2485 = vmatpush1.bf16.msra.mxu0 0
        %2486 = vmatprep.subr.bf16.mxu0 0
        %2487 = vmatpush1.bf16.msra.mxu0 0
        %2488 = vmatprep.mubr.bf16.mxu0 0
        %2489 = vmatmul.mubr.bf16.gmra.mrb[0].mxu0 %v2390
        %v2490 = vpop.f32.mrb[0].mxu0
        %v2491 = vadd.f32 %v2407, %v2490
        %v2492 = vpop.f32.mrb[0].mxu0
        %v2493 = vpop.f32.mrb[0].mxu0
        %v2494 = vpop.f32.mrb[0].mxu0
        %2495 = vdwg.mxu0
        %v2496 = vmax.f32 %v2491, 0.0
        %v2497 = vlaneseq
        %v2498 = vshrl.u32 %v2497, 7
        %v2499 = vsub.s32 0, %v2498
        %v2500 = vrot.slane %v2496, %v2499
        %v2501 = vmul.f32 %v2272, %v2500
        %v2502 = vmul.f32 %v2273, %v2500
        %v2503 = vpack.c.bf16 %v2502, %v2501
        %v2504 = vld [vmem:[#allocation9] sm:$0xf]
        %v2505 = vld [vmem:[#allocation9 + $0x4] sm:$0xf]
        %v2506 = vld [vmem:[#allocation9 + $0x8] sm:$0xf]
        %v2507 = vld [vmem:[#allocation9 + $0xc] sm:$0xf]
        %v2508 = vld [vmem:[#allocation9 + $0x10] sm:$0xf]
        %v2509 = vld [vmem:[#allocation9 + $0x14] sm:$0xf]
        %v2510 = vld [vmem:[#allocation9 + $0x18] sm:$0xf]
        %v2511 = vld [vmem:[#allocation9 + $0x1c] sm:$0xf]
        %v2512 = vld [vmem:[#allocation9 + $0x20] sm:$0xf]
        %v2513 = vld [vmem:[#allocation9 + $0x24] sm:$0xf]
        %v2514 = vld [vmem:[#allocation9 + $0x28] sm:$0xf]
        %v2515 = vld [vmem:[#allocation9 + $0x2c] sm:$0xf]
        %v2516 = vld [vmem:[#allocation9 + $0x30] sm:$0xf]
        %v2517 = vld [vmem:[#allocation9 + $0x34] sm:$0xf]
        %v2518 = vld [vmem:[#allocation9 + $0x38] sm:$0xf]
        %v2519 = vld [vmem:[#allocation9 + $0x3c] sm:$0xf]
        %v2520 = vld [vmem:[%s10] sm:$0x1]
        %v2522 = vlaneseq
        %v2523 = vshrl.u32 %v2522, 7
        %v2524 = vsub.s32 0, %v2523
        %v2525 = vrot.slane %v2520, %v2524
        %v2543 = vunpack.c.l.b16 %v2504
        %v2544 = vunpack.c.l.b16 %v2505
        %v2545 = vunpack.c.l.b16 %v2506
        %v2546 = vunpack.c.l.b16 %v2507
        %v2547 = vunpack.c.l.b16 %v2508
        %v2548 = vunpack.c.l.b16 %v2509
        %v2549 = vunpack.c.l.b16 %v2510
        %v2550 = vunpack.c.l.b16 %v2511
        %v2551 = vunpack.c.l.b16 %v2512
        %v2552 = vunpack.c.l.b16 %v2513
        %v2553 = vunpack.c.l.b16 %v2514
        %v2554 = vunpack.c.l.b16 %v2515
        %v2555 = vunpack.c.l.b16 %v2516
        %v2556 = vunpack.c.l.b16 %v2517
        %v2557 = vunpack.c.l.b16 %v2518
        %v2558 = vunpack.c.l.b16 %v2519
        %v2559 = vpack.c.b16 %v2544, %v2543
        %v2560 = vpack.c.b16 %v2546, %v2545
        %v2561 = vpack.c.b16 %v2548, %v2547
        %v2562 = vpack.c.b16 %v2550, %v2549
        %v2563 = vpack.c.b16 %v2552, %v2551
        %v2564 = vpack.c.b16 %v2554, %v2553
        %v2565 = vpack.c.b16 %v2556, %v2555
        %v2566 = vpack.c.b16 %v2558, %v2557
        %2575 = vmatprep.subr.bf16.mxu0 0
        %2576 = vmatpush1.bf16.msra.mxu0 %v2559
        %2577 = vmatprep.subr.bf16.mxu0 0
        %2578 = vmatpush1.bf16.msra.mxu0 %v2560
        %2579 = vmatprep.subr.bf16.mxu0 0
        %2580 = vmatpush1.bf16.msra.mxu0 %v2561
        %2581 = vmatprep.subr.bf16.mxu0 0
        %2582 = vmatpush1.bf16.msra.mxu0 %v2562
        %2583 = vmatprep.subr.bf16.mxu0 0
        %2584 = vmatpush1.bf16.msra.mxu0 %v2563
        %2585 = vmatprep.subr.bf16.mxu0 0
        %2586 = vmatpush1.bf16.msra.mxu0 %v2564
        %2587 = vmatprep.subr.bf16.mxu0 0
        %2588 = vmatpush1.bf16.msra.mxu0 %v2565
        %2589 = vmatprep.subr.bf16.mxu0 0
        %2590 = vmatpush1.bf16.msra.mxu0 %v2566
        %2591 = vmatprep.subr.bf16.mxu0 0
        %2592 = vmatpush1.bf16.msra.mxu0 0
        %2593 = vmatprep.subr.bf16.mxu0 0
        %2594 = vmatpush1.bf16.msra.mxu0 0
        %2595 = vmatprep.subr.bf16.mxu0 0
        %2596 = vmatpush1.bf16.msra.mxu0 0
        %2597 = vmatprep.subr.bf16.mxu0 0
        %2598 = vmatpush1.bf16.msra.mxu0 0
        %2599 = vmatprep.subr.bf16.mxu0 0
        %2600 = vmatpush1.bf16.msra.mxu0 0
        %2601 = vmatprep.subr.bf16.mxu0 0
        %2602 = vmatpush1.bf16.msra.mxu0 0
        %2603 = vmatprep.subr.bf16.mxu0 0
        %2604 = vmatpush1.bf16.msra.mxu0 0
        %2605 = vmatprep.subr.bf16.mxu0 0
        %2606 = vmatpush1.bf16.msra.mxu0 0
        %2607 = vmatprep.mubr.bf16.mxu0 0
        %2608 = vmatmul.mubr.bf16.gmra.mrb[0].mxu0 %v2503
        %v2609 = vpop.f32.mrb[0].mxu0
        %v2610 = vadd.f32 %v2525, %v2609
        %v2611 = vpop.f32.mrb[0].mxu0
        %v2612 = vpop.f32.mrb[0].mxu0
        %v2613 = vadd.f32 %v2525, %v2612
        %v2614 = vpop.f32.mrb[0].mxu0
        %2615 = vdwg.mxu0
        %2616 = vst [vmem:[%s439] sm:$0xff] %v2610
        %2617 = vst [vmem:[%s439 + $0x8] sm:$0xff] %v2613
        %s2618 = sand.u32 %s272, 1
        %s2619 = scalar_lea.sflag [#allocation5], %s2618
        %s2620 = sand.u32 %s272, 1
        %s2621 = smul.addr %s2620, 16
        %s2622 = scalar_lea.vmem [#allocation11], %s2621
        // Predicated region
        $region81: #{tpu_custom_call.1} parent=63 // pred_check
          %p2623 = pneg %p282
        $region82: #{tpu_custom_call.1} parent=63 // pred_check_branch
          %2625 = sbr.rel (%p2623) target = $region84
        $region83: #{tpu_custom_call.1} parent=63 // pred_region
          %s2626 = smul.u32 2, %s28
          %s2628 = ssub.s32 256, 256
          %2629 = vsyncadd %s2619, %s2628
          %s2630 = smul.addr %s2626, 128
          %s2631 = scalar_lea.hbm %s11, %s2630
          %s2632 = sshll.u32 %s2622, 4
          %s2633 = int_to_ptr.vmem [resolvable:$true] %s2632
          %2638 = dma.vmem_to_hbm [thread:$0]  %s2633, 256, %s2631, %s2619, 128, 128, 8
        $region84: #{tpu_custom_call.1} parent=63 // pred_fallthru
          _
      $region64: #{tpu_custom_call.1} parent=5 // pred_fallthru
        _
      %p2639 = scmp.le.s32.totalorder 2, %s23
      // Predicated region
      $region85: #{tpu_custom_call.1} parent=5 // pred_check
        %p2640 = pneg %p2639
      $region86: #{tpu_custom_call.1} parent=5 // pred_check_branch
        %2642 = sbr.rel (%p2640) target = $region88
      $region87: #{tpu_custom_call.1} parent=5 // pred_region
        %s2643 = ssub.s32 %s23, 2
        // Predicated region
        $region89: #{tpu_custom_call.1} parent=87 // pred_check
          %p2644 = pneg %p288
        $region90: #{tpu_custom_call.1} parent=87 // pred_check_branch
          %2646 = sbr.rel (%p2644) target = $region92
        $region91: #{tpu_custom_call.1} parent=87 // pred_region
          %s2647 = sand.u32 %s273, 1
          %s2648 = scalar_lea.sflag [#allocation5], %s2647
          %s2649 = sand.u32 %s273, 1
          %s2650 = smul.addr %s2649, 16
          %s2651 = scalar_lea.vmem [#allocation11], %s2650
          %2652 = dma.done %s2648, 256
        $region92: #{tpu_custom_call.1} parent=87 // pred_fallthru
          _
      $region88: #{tpu_custom_call.1} parent=5 // pred_fallthru
        _
    $region6: #{tpu_custom_call.1} parent=1 // loop_footer
      %s27 = sadd.s32 1, %s23
    $region7: #{tpu_custom_call.1} parent=1 // loop_footer_branch
      %22 = sbr.rel target = $region3
    $region8: #{tpu_custom_call.1} parent=1 // loop_exit
      _
    %2653 = vsyncpa [#allocation4], 1
    %s2654 = scalar_lea.sflag [#allocation4], 1
    %2655 = vsyncpa %s2654, 1
    %2656 = vsyncpa [#allocation7], 1
    %2657 = vsyncpa [#allocation10], 1
    %2658 = vsyncpa [#allocation5], 1
    %s2659 = scalar_lea.sflag [#allocation5], 1
    %2660 = vsyncpa %s2659, 1

</llo_original>
